<compile_context>
chip_gen: v5e
topology: v5e:2x2
jax: 0.10.0
libtpu: 0.0.40
codegen_flags: <defaults>
</compile_context>

<pallas_src>
import functools

import jax
import jax.numpy as jnp
from jax.experimental import pallas as pl
from jax.experimental.pallas import tpu as pltpu


def _se_matmul_bn_kernel(eps, inv_p,
                         gate_ref, x_ref, w2_ref, gamma_ref, beta_ref,
                         out_ref, acc_ref):
    k = pl.program_id(1)

    @pl.when(k == 0)
    def _init():
        acc_ref[...] = jnp.zeros_like(acc_ref)

    # squeeze-excite gate on this Cmid chunk: [P, tk] * [1, tk]
    xg = (x_ref[...].astype(jnp.float32) * gate_ref[...]).astype(jnp.bfloat16)
    # 1x1 conv chunk (bf16 MXU matmul, f32 accumulation): [P, tk] @ [tk, tn]
    acc_ref[...] += jnp.dot(xg, w2_ref[...], preferred_element_type=jnp.float32)

    @pl.when(k == pl.num_programs(1) - 1)
    def _finalize():
        y = acc_ref[...]
        # one-pass training-mode BN statistics over the N*H*W rows (biased variance)
        mean = jnp.sum(y, axis=0, keepdims=True) * inv_p
        ex2 = jnp.sum(y * y, axis=0, keepdims=True) * inv_p
        var = jnp.maximum(ex2 - mean * mean, 0.0)
        y_hat = (y - mean) * jax.lax.rsqrt(var + eps)
        out_ref[...] = (y_hat * gamma_ref[...] + beta_ref[...]).astype(out_ref.dtype)


@functools.partial(jax.jit, static_argnames=("eps",))
def fused_forward(x581, x578, w1_bf16, b1, w2_bf16, gamma, beta, eps=1e-3):
    """x581: [N,Cin,1,1] f32, x578: [N,Cmid,H,W] f32 (NCHW).
    w1_bf16: [Cin,Cmid] bf16, w2_bf16: [Cmid,Cout] bf16 (bandwidth-optimal storage).
    Returns NCHW [N,Cout,H,W] f32."""
    N, Cin, _, _ = x581.shape
    _, Cmid, H, W = x578.shape
    Cout = w2_bf16.shape[1]
    P = N * H * W
    assert N == 1, "kernel assumes batch 1 (matches the reference module inputs)"

    # ---- gate path (tiny, ~0.8 MFLOP): hoisted to XLA; bf16 matvec, f32 accumulation.
    x_vec = x581.reshape(N, Cin).astype(jnp.bfloat16)
    z = jnp.dot(x_vec, w1_bf16, preferred_element_type=jnp.float32) + b1[None, :]
    gate = jax.nn.sigmoid(z)                                        # [1, Cmid] f32

    # ---- activation: single fused NCHW->NHWC transpose + bf16 cast (one HBM pass).
    x_t = jnp.transpose(x578, (0, 2, 3, 1)).reshape(P, Cmid).astype(jnp.bfloat16)

    # ---- tiling: Cout-parallel blocks (megacore on v7x) x Cmid reduction (pipelined DMA)
    tn = 256 if Cout % 256 == 0 else Cout
    tk = 768 if Cmid % 768 == 0 else Cmid
    J, K = Cout // tn, Cmid // tk

    kernel = functools.partial(_se_matmul_bn_kernel, eps, 1.0 / P)
    out = pl.pallas_call(
        kernel,
        out_shape=jax.ShapeDtypeStruct((P, Cout), jnp.float32),
        grid=(J, K),
        in_specs=[
            pl.BlockSpec((1, tk), lambda j, k: (0, k)),     # gate   [1, Cmid] f32
            pl.BlockSpec((P, tk), lambda j, k: (0, k)),     # x NHWC [P, Cmid] bf16
            pl.BlockSpec((tk, tn), lambda j, k: (k, j)),    # w2     [Cmid, Cout] bf16
            pl.BlockSpec((1, tn), lambda j, k: (0, j)),     # gamma
            pl.BlockSpec((1, tn), lambda j, k: (0, j)),     # beta
        ],
        out_specs=pl.BlockSpec((P, tn), lambda j, k: (0, j)),
        scratch_shapes=[pltpu.VMEM((P, tn), jnp.float32)],  # f32 accumulator
        compiler_params=pltpu.CompilerParams(
            dimension_semantics=("parallel", "arbitrary")),
        cost_estimate=pl.CostEstimate(
            flops=2 * P * Cmid * Cout + 6 * P * Cout,
            transcendentals=Cout,
            bytes_accessed=(Cmid * Cout * 2 + P * Cmid * 2 + Cmid * 4
                            + P * Cout * 4 + 2 * Cout * 4)),
    )(gate, x_t, w2_bf16, gamma.reshape(1, Cout), beta.reshape(1, Cout))

    return jnp.transpose(out.reshape(N, H, W, Cout), (0, 3, 1, 2))


def reference_forward(x581, x578, w1, b1, w2, gamma, beta, eps=1e-3):
    """Plain-JAX f32 reference with the module's exact semantics."""
    N, Cin, _, _ = x581.shape
    _, Cmid, H, W = x578.shape
    gate = jax.nn.sigmoid(x581.reshape(N, Cin) @ w1 + b1[None, :])      # [N,Cmid]
    x = gate[:, None, None, :] * jnp.transpose(x578, (0, 2, 3, 1))      # [N,H,W,Cmid]
    y = x.reshape(N * H * W, Cmid) @ w2                                 # [P,Cout]
    mean = jnp.mean(y, axis=0, keepdims=True)
    var = jnp.mean(jnp.square(y - mean), axis=0, keepdims=True)
    y = (y - mean) * jax.lax.rsqrt(var + eps) * gamma[None, :] + beta[None, :]
    return jnp.transpose(y.reshape(N, H, W, -1), (0, 3, 1, 2))


if __name__ == "__main__":
    # Shapes implied by the module: gate input 1x128x1x1, activation 1x3072x7x7.
    N, Cin, Cmid, Cout, H, W = 1, 128, 3072, 512, 7, 7
    eps = 1e-3

    key = jax.random.PRNGKey(0)
    k1, k2, k3, k4, k5 = jax.random.split(key, 5)

    # Canonical f32 parameters (conv weights stored as [in, out] for matmul).
    w1 = jax.random.normal(k1, (Cin, Cmid), jnp.float32) * (1.0 / jnp.sqrt(Cin))
    b1 = jax.random.normal(k2, (Cmid,), jnp.float32) * 0.1
    w2 = jax.random.normal(k3, (Cmid, Cout), jnp.float32) * (1.0 / jnp.sqrt(Cmid))
    gamma = jnp.ones((Cout,), jnp.float32)      # BatchNorm2d default affine init
    beta = jnp.zeros((Cout,), jnp.float32)

    # Inputs (NCHW, matching the PyTorch module's forward signature).
    x581 = jax.random.normal(k4, (N, Cin, 1, 1), jnp.float32)
    x578 = jax.random.normal(k5, (N, Cmid, H, W), jnp.float32)

    # Weights are stored / streamed in bf16 (conversion done once, outside the hot path).
    w1_b = w1.astype(jnp.bfloat16)
    w2_b = w2.astype(jnp.bfloat16)

    out = fused_forward(x581, x578, w1_b, b1, w2_b, gamma, beta, eps=eps)
    out = jax.block_until_ready(out)

    ref = reference_forward(x581, x578, w1, b1, w2, gamma, beta, eps)
    assert out.shape == (N, Cout, H, W), out.shape
    max_err = float(jnp.max(jnp.abs(out - ref)))
    # bf16 weights / activations with f32 accumulation: ~1e-2-scale tolerance vs f32 ref.
    assert jnp.allclose(out, ref, rtol=2e-2, atol=2e-2), max_err

    print("KERNEL_OK")
</pallas_src>

<mosaic_0001>
module attributes {stable_mosaic.version = 11 : i64} {
  func.func @_se_matmul_bn_kernel(%arg0: i32, %arg1: i32, %arg2: memref<1x768xf32, #tpu.memory_space<vmem>>, %arg3: memref<49x768xbf16, #tpu.memory_space<vmem>>, %arg4: memref<768x256xbf16, #tpu.memory_space<vmem>>, %arg5: memref<1x256xf32, #tpu.memory_space<vmem>>, %arg6: memref<1x256xf32, #tpu.memory_space<vmem>>, %arg7: memref<49x256xf32, #tpu.memory_space<vmem>>, %arg8: memref<49x256xf32, #tpu.memory_space<vmem>>) attributes {dimension_semantics = [#tpu.dimension_semantics<parallel>, #tpu.dimension_semantics<arbitrary>], iteration_bounds = array<i64: 2, 4>, scalar_prefetch = 0 : i64, scratch_operands = 1 : i64, tpu.core_type = #tpu.core_type<tc>, window_params = [{transform_indices = @transform_0, window_bounds = array<i64: 1, 768>}, {transform_indices = @transform_1, window_bounds = array<i64: 49, 768>}, {transform_indices = @transform_2, window_bounds = array<i64: 768, 256>}, {transform_indices = @transform_3, window_bounds = array<i64: 1, 256>}, {transform_indices = @transform_4, window_bounds = array<i64: 1, 256>}, {transform_indices = @transform_5, window_bounds = array<i64: 49, 256>}]} {
    %c0_i32 = arith.constant 0 : i32
    %0 = arith.cmpi eq, %arg1, %c0_i32 : i32
    %1 = arith.extui %0 : i1 to i32
    %c0_i32_0 = arith.constant 0 : i32
    %2 = arith.cmpi ne, %1, %c0_i32_0 : i32
    scf.if %2 {
      %cst_11 = arith.constant 0.000000e+00 : f32
      %17 = vector.broadcast %cst_11 : f32 to vector<49x256xf32>
      %c0_12 = arith.constant 0 : index
      %c0_13 = arith.constant 0 : index
      %18 = vector.load %arg8[%c0_12, %c0_13] : memref<49x256xf32, #tpu.memory_space<vmem>>, vector<49x256xf32>
      tpu.vector_store %arg8[%c0_12, %c0_13], %17 {strides = array<i32>} : memref<49x256xf32, #tpu.memory_space<vmem>>, vector<49x256xf32>,
    } else {
    }
    %c0 = arith.constant 0 : index
    %c0_1 = arith.constant 0 : index
    %3 = vector.load %arg3[%c0, %c0_1] : memref<49x768xbf16, #tpu.memory_space<vmem>>, vector<49x768xbf16>
    %4 = arith.extf %3 : vector<49x768xbf16> to vector<49x768xf32>
    %c0_2 = arith.constant 0 : index
    %c0_3 = arith.constant 0 : index
    %5 = vector.load %arg2[%c0_2, %c0_3] : memref<1x768xf32, #tpu.memory_space<vmem>>, vector<1x768xf32>
    %6 = vector.broadcast %5 : vector<1x768xf32> to vector<49x768xf32>
    %7 = arith.mulf %4, %6 : vector<49x768xf32>
    %8 = arith.truncf %7 : vector<49x768xf32> to vector<49x768xbf16>
    %c0_4 = arith.constant 0 : index
    %c0_5 = arith.constant 0 : index
    %9 = vector.load %arg8[%c0_4, %c0_5] : memref<49x256xf32, #tpu.memory_space<vmem>>, vector<49x256xf32>
    %c0_6 = arith.constant 0 : index
    %c0_7 = arith.constant 0 : index
    %10 = vector.load %arg4[%c0_6, %c0_7] : memref<768x256xbf16, #tpu.memory_space<vmem>>, vector<768x256xbf16>
    %cst = arith.constant dense<0.000000e+00> : vector<49x256xf32>
    %11 = tpu.matmul %8, %10, %cst {dimension_numbers = #tpu.dot_dimension_numbers<[1], [0], [0], [1], [0, 0, 1, 1], [], []>} : vector<49x768xbf16>, vector<768x256xbf16>, vector<49x256xf32> -> vector<49x256xf32>
    %12 = arith.addf %9, %11 : vector<49x256xf32>
    %c0_8 = arith.constant 0 : index
    %c0_9 = arith.constant 0 : index
    %13 = vector.load %arg8[%c0_8, %c0_9] : memref<49x256xf32, #tpu.memory_space<vmem>>, vector<49x256xf32>
    tpu.vector_store %arg8[%c0_8, %c0_9], %12 {strides = array<i32>} : memref<49x256xf32, #tpu.memory_space<vmem>>, vector<49x256xf32>,
    %c3_i32 = arith.constant 3 : i32
    %14 = arith.cmpi eq, %arg1, %c3_i32 : i32
    %15 = arith.extui %14 : i1 to i32
    %c0_i32_10 = arith.constant 0 : i32
    %16 = arith.cmpi ne, %15, %c0_i32_10 : i32
    scf.if %16 {
      %c0_11 = arith.constant 0 : index
      %c0_12 = arith.constant 0 : index
      %17 = vector.load %arg8[%c0_11, %c0_12] : memref<49x256xf32, #tpu.memory_space<vmem>>, vector<49x256xf32>
      %cst_13 = arith.constant dense<0.000000e+00> : vector<256xf32>
      %18 = vector.multi_reduction <add>, %17, %cst_13 [0] : vector<49x256xf32> to vector<256xf32>
      %19 = vector.shape_cast %18 : vector<256xf32> to vector<1x256xf32>
      %cst_14 = arith.constant 0.0204081628 : f32
      %20 = vector.broadcast %cst_14 : f32 to vector<1x256xf32>
      %21 = arith.mulf %19, %20 : vector<1x256xf32>
      %22 = arith.mulf %17, %17 : vector<49x256xf32>
      %cst_15 = arith.constant dense<0.000000e+00> : vector<256xf32>
      %23 = vector.multi_reduction <add>, %22, %cst_15 [0] : vector<49x256xf32> to vector<256xf32>
      %24 = vector.shape_cast %23 : vector<256xf32> to vector<1x256xf32>
      %cst_16 = arith.constant 0.0204081628 : f32
      %25 = vector.broadcast %cst_16 : f32 to vector<1x256xf32>
      %26 = arith.mulf %24, %25 : vector<1x256xf32>
      %27 = arith.mulf %21, %21 : vector<1x256xf32>
      %28 = arith.subf %26, %27 : vector<1x256xf32>
      %cst_17 = arith.constant 0.000000e+00 : f32
      %29 = vector.broadcast %cst_17 : f32 to vector<1x256xf32>
      %30 = arith.maximumf %28, %29 : vector<1x256xf32>
      %31 = vector.broadcast %21 : vector<1x256xf32> to vector<49x256xf32>
      %32 = arith.subf %17, %31 : vector<49x256xf32>
      %cst_18 = arith.constant 1.000000e-03 : f32
      %33 = vector.broadcast %cst_18 : f32 to vector<1x256xf32>
      %34 = arith.addf %30, %33 : vector<1x256xf32>
      %35 = math.rsqrt %34 : vector<1x256xf32>
      %36 = vector.broadcast %35 : vector<1x256xf32> to vector<49x256xf32>
      %37 = arith.mulf %32, %36 : vector<49x256xf32>
      %c0_19 = arith.constant 0 : index
      %c0_20 = arith.constant 0 : index
      %38 = vector.load %arg5[%c0_19, %c0_20] : memref<1x256xf32, #tpu.memory_space<vmem>>, vector<1x256xf32>
      %39 = vector.broadcast %38 : vector<1x256xf32> to vector<49x256xf32>
      %40 = arith.mulf %37, %39 : vector<49x256xf32>
      %c0_21 = arith.constant 0 : index
      %c0_22 = arith.constant 0 : index
      %41 = vector.load %arg6[%c0_21, %c0_22] : memref<1x256xf32, #tpu.memory_space<vmem>>, vector<1x256xf32>
      %42 = vector.broadcast %41 : vector<1x256xf32> to vector<49x256xf32>
      %43 = arith.addf %40, %42 : vector<49x256xf32>
      %c0_23 = arith.constant 0 : index
      %c0_24 = arith.constant 0 : index
      %44 = vector.load %arg7[%c0_23, %c0_24] : memref<49x256xf32, #tpu.memory_space<vmem>>, vector<49x256xf32>
      tpu.vector_store %arg7[%c0_23, %c0_24], %43 {strides = array<i32>} : memref<49x256xf32, #tpu.memory_space<vmem>>, vector<49x256xf32>,
    } else {
    }
    return
  }
  func.func @transform_0(%arg0: i32, %arg1: i32) -> (i32, i32) {
    %c0_i32 = arith.constant 0 : i32
    %c0_i32_0 = arith.constant 0 : i32
    return %c0_i32, %arg1 : i32, i32
  }
  func.func @transform_1(%arg0: i32, %arg1: i32) -> (i32, i32) {
    %c0_i32 = arith.constant 0 : i32
    %c0_i32_0 = arith.constant 0 : i32
    return %c0_i32, %arg1 : i32, i32
  }
  func.func @transform_2(%arg0: i32, %arg1: i32) -> (i32, i32) {
    %c0_i32 = arith.constant 0 : i32
    return %arg1, %arg0 : i32, i32
  }
  func.func @transform_3(%arg0: i32, %arg1: i32) -> (i32, i32) {
    %c0_i32 = arith.constant 0 : i32
    %c0_i32_0 = arith.constant 0 : i32
    return %c0_i32, %arg0 : i32, i32
  }
  func.func @transform_4(%arg0: i32, %arg1: i32) -> (i32, i32) {
    %c0_i32 = arith.constant 0 : i32
    %c0_i32_0 = arith.constant 0 : i32
    return %c0_i32, %arg0 : i32, i32
  }
  func.func @transform_5(%arg0: i32, %arg1: i32) -> (i32, i32) {
    %c0_i32 = arith.constant 0 : i32
    %c0_i32_0 = arith.constant 0 : i32
    return %c0_i32, %arg0 : i32, i32
  }
}

</mosaic_0001>

<llo_original>
// kernel: fused_forward.1
$region0: #{fused_forward.1}
  #allocation0 [shape = 'u32[]', space=smem, size = 0x4, offset = 0x4, fixed_abs, tag = 'smem constant byte address 0x4 - core index']
  #allocation1 [shape = 'u32[72,128]{1,0:T(1,128)}', space=vmem, size = 0x9000, scoped, tag = 'internal scratch']
  #allocation2 [shape = 'f32[49,256]{1,0:T(8,128)}', space=vmem, size = 0xe000, scoped, tag = 'scratch operand']
  %s0 = inlined_call_operand.vmem [shape: f32[1,3072], index: 0, kind: input, shape index: {}]
  %s1 = inlined_call_operand.vmem [shape: bf16[49,3072], index: 1, kind: input, shape index: {}]
  %s2 = inlined_call_operand.hbm [shape: bf16[3072,512], index: 2, kind: input, shape index: {}]
  %s3 = inlined_call_operand.vmem [shape: f32[1,512], index: 3, kind: input, shape index: {}]
  %s4 = inlined_call_operand.vmem [shape: f32[1,512], index: 4, kind: input, shape index: {}]
  %s5 = inlined_call_operand.vmem [shape: f32[49,512], index: 5, kind: output, shape index: {}]
  %s6 = sld [smem:[#allocation0]]
  $region107: #{fused_forward.1} parent=0
    _
  %s8 = ssub.s32 1, %s6
  %s9 = scalar_select 0, %s8, %s6
  $region1: #{fused_forward.1} parent=0
    #allocation3 [shape = 'u8[172032]{0}', space=vmem, size = 0x2a000, scoped, tag = 'input window, operand 1']
    #allocation4 [shape = 'u8[786432]{0}', space=vmem, size = 0xc0000, scoped, tag = 'input window, operand 2']
    #allocation5 [shape = 's32[2]{0}', space=sflag, size = 0x8, scoped, tag = 'scoped memory for fused_forward.1']
    #allocation6 [shape = 'u8[114688]{0}', space=vmem, size = 0x1c000, scoped, tag = 'output window, operand 0']
    %10 = vsyncpa [#allocation5], 0
    %s11 = scalar_lea.sflag [#allocation5], 1
    %12 = vsyncpa %s11, 0
    loop: start=0, step=1, limit=10
    $region2: #{fused_forward.1} parent=1 // loop_pre_header
      _
    $region3: #{fused_forward.1} parent=1 // loop_header
      %s14 = sphi 0, %s18
      %p15 = scmp.ge.s32.totalorder %s14, 10
      %s21 = sphi 0, %s33
      %s22 = sphi 0, %s29
      %s23 = sphi 0, %s21
      %s24 = sphi 0, %s22
      %s25 = sphi 0, %s23
      %s26 = sphi 0, %s24
      %s36 = sphi 0, %s38
      %s39 = sphi 0, %s36
      %s40 = sphi 0, %s39
      %s56 = sphi 0, %s40
      %s62 = sphi 0, %s64
      %s65 = sphi 0, %s62
      %s66 = sphi 0, %s65
      %s82 = sphi 0, %s66
      %s90 = sphi 0, %s92
      %s93 = sphi 0, %s90
      %s94 = sphi 0, %s93
      %s110 = sphi 0, %s94
      %s116 = sphi 0, %s118
      %s119 = sphi 0, %s116
      %s120 = sphi 0, %s119
      %s136 = sphi 0, %s120
      %s142 = sphi 0, %s144
      %s145 = sphi 0, %s142
      %s146 = sphi 0, %s145
      %s162 = sphi 0, %s146
      %s168 = sphi 0, %s170
      %s171 = sphi 0, %s168
      %s172 = sphi 0, %s171
      %s188 = sphi 0, %s172
    $region4: #{fused_forward.1} parent=1 // loop_header_branch
      %17 = sbr.rel (%p15) target = $region8
    $region5: #{fused_forward.1} parent=1 // loop_body
      %s19 = ssub.s32 %s14, 1
      %s20 = ssub.s32 %s14, 2
      %s27 = sadd.s32 1, %s22
      %p28 = scmp.ge.s32.totalorder %s27, 4
      %s29 = scalar_select %p28, 0, %s27
      %s30 = sadd.s32 1, %s21
      %s31 = scalar_select %p28, %s30, %s21
      %p32 = scmp.ge.s32.totalorder %s31, 2
      %s33 = scalar_select %p32, 0, %s31
      %s34 = ssub.s32 %s22, %s29
      %p35 = scmp.eq.s32.totalorder %s34, 0
      %s37 = sadd.s32 %s36, 1
      %s38 = scalar_select %p35, %s36, %s37
      %p41 = pneg %p35
      %p42 = scmp.eq.s32.totalorder %s14, 7
      %p43 = por %p41, %p42
      %p44 = scmp.ne.s32.totalorder %s36, %s39
      %p45 = scmp.eq.s32.totalorder %s14, 0
      %p46 = por %p44, %p45
      %p47 = scmp.ne.s32.totalorder %s36, %s39
      %p48 = scmp.eq.s32.totalorder %s19, 7
      %p49 = por %p47, %p48
      %p50 = scmp.ne.s32.totalorder %s39, %s40
      %p51 = scmp.eq.s32.totalorder %s19, 0
      %p52 = por %p50, %p51
      %p53 = scmp.ne.s32.totalorder %s39, %s40
      %p54 = scmp.eq.s32.totalorder %s20, 7
      %p55 = por %p53, %p54
      %p57 = scmp.ne.s32.totalorder %s40, %s56
      %p58 = scmp.eq.s32.totalorder %s20, 0
      %p59 = por %p57, %p58
      %s60 = ssub.s32 %s22, %s29
      %p61 = scmp.eq.s32.totalorder %s60, 0
      %s63 = sadd.s32 %s62, 1
      %s64 = scalar_select %p61, %s62, %s63
      %p67 = pneg %p61
      %p68 = scmp.eq.s32.totalorder %s14, 7
      %p69 = por %p67, %p68
      %p70 = scmp.ne.s32.totalorder %s62, %s65
      %p71 = scmp.eq.s32.totalorder %s14, 0
      %p72 = por %p70, %p71
      %p73 = scmp.ne.s32.totalorder %s62, %s65
      %p74 = scmp.eq.s32.totalorder %s19, 7
      %p75 = por %p73, %p74
      %p76 = scmp.ne.s32.totalorder %s65, %s66
      %p77 = scmp.eq.s32.totalorder %s19, 0
      %p78 = por %p76, %p77
      %p79 = scmp.ne.s32.totalorder %s65, %s66
      %p80 = scmp.eq.s32.totalorder %s20, 7
      %p81 = por %p79, %p80
      %p83 = scmp.ne.s32.totalorder %s66, %s82
      %p84 = scmp.eq.s32.totalorder %s20, 0
      %p85 = por %p83, %p84
      %s86 = ssub.s32 %s22, %s29
      %s87 = ssub.s32 %s21, %s33
      %s88 = sor.u32 %s86, %s87
      %p89 = scmp.eq.s32.totalorder %s88, 0
      %s91 = sadd.s32 %s90, 1
      %s92 = scalar_select %p89, %s90, %s91
      %p95 = pneg %p89
      %p96 = scmp.eq.s32.totalorder %s14, 7
      %p97 = por %p95, %p96
      %p98 = scmp.ne.s32.totalorder %s90, %s93
      %p99 = scmp.eq.s32.totalorder %s14, 0
      %p100 = por %p98, %p99
      %p101 = scmp.ne.s32.totalorder %s90, %s93
      %p102 = scmp.eq.s32.totalorder %s19, 7
      %p103 = por %p101, %p102
      %p104 = scmp.ne.s32.totalorder %s93, %s94
      %p105 = scmp.eq.s32.totalorder %s19, 0
      %p106 = por %p104, %p105
      %p107 = scmp.ne.s32.totalorder %s93, %s94
      %p108 = scmp.eq.s32.totalorder %s20, 7
      %p109 = por %p107, %p108
      %p111 = scmp.ne.s32.totalorder %s94, %s110
      %p112 = scmp.eq.s32.totalorder %s20, 0
      %p113 = por %p111, %p112
      %s114 = ssub.s32 %s21, %s33
      %p115 = scmp.eq.s32.totalorder %s114, 0
      %s117 = sadd.s32 %s116, 1
      %s118 = scalar_select %p115, %s116, %s117
      %p121 = pneg %p115
      %p122 = scmp.eq.s32.totalorder %s14, 7
      %p123 = por %p121, %p122
      %p124 = scmp.ne.s32.totalorder %s116, %s119
      %p125 = scmp.eq.s32.totalorder %s14, 0
      %p126 = por %p124, %p125
      %p127 = scmp.ne.s32.totalorder %s116, %s119
      %p128 = scmp.eq.s32.totalorder %s19, 7
      %p129 = por %p127, %p128
      %p130 = scmp.ne.s32.totalorder %s119, %s120
      %p131 = scmp.eq.s32.totalorder %s19, 0
      %p132 = por %p130, %p131
      %p133 = scmp.ne.s32.totalorder %s119, %s120
      %p134 = scmp.eq.s32.totalorder %s20, 7
      %p135 = por %p133, %p134
      %p137 = scmp.ne.s32.totalorder %s120, %s136
      %p138 = scmp.eq.s32.totalorder %s20, 0
      %p139 = por %p137, %p138
      %s140 = ssub.s32 %s21, %s33
      %p141 = scmp.eq.s32.totalorder %s140, 0
      %s143 = sadd.s32 %s142, 1
      %s144 = scalar_select %p141, %s142, %s143
      %p147 = pneg %p141
      %p148 = scmp.eq.s32.totalorder %s14, 7
      %p149 = por %p147, %p148
      %p150 = scmp.ne.s32.totalorder %s142, %s145
      %p151 = scmp.eq.s32.totalorder %s14, 0
      %p152 = por %p150, %p151
      %p153 = scmp.ne.s32.totalorder %s142, %s145
      %p154 = scmp.eq.s32.totalorder %s19, 7
      %p155 = por %p153, %p154
      %p156 = scmp.ne.s32.totalorder %s145, %s146
      %p157 = scmp.eq.s32.totalorder %s19, 0
      %p158 = por %p156, %p157
      %p159 = scmp.ne.s32.totalorder %s145, %s146
      %p160 = scmp.eq.s32.totalorder %s20, 7
      %p161 = por %p159, %p160
      %p163 = scmp.ne.s32.totalorder %s146, %s162
      %p164 = scmp.eq.s32.totalorder %s20, 0
      %p165 = por %p163, %p164
      %s166 = ssub.s32 %s21, %s33
      %p167 = scmp.eq.s32.totalorder %s166, 0
      %s169 = sadd.s32 %s168, 1
      %s170 = scalar_select %p167, %s168, %s169
      %p173 = pneg %p167
      %p174 = scmp.eq.s32.totalorder %s14, 7
      %p175 = por %p173, %p174
      %p176 = scmp.ne.s32.totalorder %s168, %s171
      %p177 = scmp.eq.s32.totalorder %s14, 0
      %p178 = por %p176, %p177
      %p179 = scmp.ne.s32.totalorder %s168, %s171
      %p180 = scmp.eq.s32.totalorder %s19, 7
      %p181 = por %p179, %p180
      %p182 = scmp.ne.s32.totalorder %s171, %s172
      %p183 = scmp.eq.s32.totalorder %s19, 0
      %p184 = por %p182, %p183
      %p185 = scmp.ne.s32.totalorder %s171, %s172
      %p186 = scmp.eq.s32.totalorder %s20, 7
      %p187 = por %p185, %p186
      %p189 = scmp.ne.s32.totalorder %s172, %s188
      %p190 = scmp.eq.s32.totalorder %s20, 0
      %p191 = por %p189, %p190
      %p192 = scmp.le.s32.totalorder 1, %s14
      %p193 = scmp.lt.s32.totalorder %s14, 9
      %p194 = pnand %p192, %p193
      %p195 = pneg %p194
      // Predicated region
      $region9: #{fused_forward.1} parent=5 // pred_check
        _
      $region10: #{fused_forward.1} parent=5 // pred_check_branch
        %197 = sbr.rel (%p194) target = $region12
      $region11: #{fused_forward.1} parent=5 // pred_region
        %s198 = ssub.s32 %s14, 1
      $region12: #{fused_forward.1} parent=5 // pred_fallthru
        _
      %p199 = scmp.lt.s32.totalorder %s14, 8
      // Predicated region
      $region13: #{fused_forward.1} parent=5 // pred_check
        %p200 = pneg %p199
      $region14: #{fused_forward.1} parent=5 // pred_check_branch
        %202 = sbr.rel (%p200) target = $region16
      $region15: #{fused_forward.1} parent=5 // pred_region
        // Predicated region
        $region17: #{fused_forward.1} parent=15 // pred_check
          %p203 = pneg %p46
        $region18: #{fused_forward.1} parent=15 // pred_check_branch
          %205 = sbr.rel (%p203) target = $region20
        $region19: #{fused_forward.1} parent=15 // pred_region
          %s206 = smul.u32 6, %s22
          %p207 = scmp.lt.s32.totalorder %s206, 23
          %s208 = scalar_select %p207, %s206, 23
          %s209 = scalar_lea.vmem %s0, %s208
          %s210 = smul.u32 6, %s22
        $region20: #{fused_forward.1} parent=15 // pred_fallthru
          _
        // Predicated region
        $region21: #{fused_forward.1} parent=15 // pred_check
          %p211 = pneg %p72
        $region22: #{fused_forward.1} parent=15 // pred_check_branch
          %213 = sbr.rel (%p211) target = $region24
        $region23: #{fused_forward.1} parent=15 // pred_region
          %s214 = sand.u32 %s62, 1
          %s215 = sand.u32 %s62, 1
          %s216 = smul.addr %s215, 168
          %s217 = scalar_lea.vmem [#allocation3], %s216
          %s218 = smul.u32 6, %s22
          %s219 = smul.addr %s218, 4
          %s220 = scalar_lea.vmem %s1, %s219
          // Predicated region
          $region25: #{fused_forward.1} parent=23 // pred_check
            _
          $region26: #{fused_forward.1} parent=23 // pred_check_branch
            %222 = sbr.rel (0) target = $region28
          $region27: #{fused_forward.1} parent=23 // pred_region
            // Predicated region
            $region29: #{fused_forward.1} parent=27 // pred_check
              _
            $region30: #{fused_forward.1} parent=27 // pred_check_branch
              %224 = sbr.rel (0) target = $region32
            $region31: #{fused_forward.1} parent=27 // pred_region
              loop: start=0, step=1, limit=1
              $region33: #{fused_forward.1} parent=31 // loop_pre_header
                _
              $region34: #{fused_forward.1} parent=31 // loop_header
                %s226 = sphi 0, %s230
                %p227 = scmp.ge.s32.totalorder %s226, 1
                %s231 = sphi %s220, %s220
                %s232 = sphi %s217, %s217
              $region35: #{fused_forward.1} parent=31 // loop_header_branch
                %229 = sbr.rel (%p227) target = $region39
              $region36: #{fused_forward.1} parent=31 // loop_body
                %v233 = vld [vmem:[%s231] sm:$0xff]
                %234 = vst [vmem:[%s232] sm:$0xff] %v233
                %v235 = vld [vmem:[%s231 + $0x8] sm:$0xff]
                %236 = vst [vmem:[%s232 + $0x8] sm:$0xff] %v235
                %v237 = vld [vmem:[%s231 + $0x10] sm:$0xff]
                %238 = vst [vmem:[%s232 + $0x10] sm:$0xff] %v237
                %v239 = vld [vmem:[%s231 + $0x60] sm:$0xff]
                %240 = vst [vmem:[%s232 + $0x18] sm:$0xff] %v239
                %v241 = vld [vmem:[%s231 + $0x68] sm:$0xff]
                %242 = vst [vmem:[%s232 + $0x20] sm:$0xff] %v241
                %v243 = vld [vmem:[%s231 + $0x70] sm:$0xff]
                %244 = vst [vmem:[%s232 + $0x28] sm:$0xff] %v243
                %v245 = vld [vmem:[%s231 + $0xc0] sm:$0xff]
                %246 = vst [vmem:[%s232 + $0x30] sm:$0xff] %v245
                %v247 = vld [vmem:[%s231 + $0xc8] sm:$0xff]
                %248 = vst [vmem:[%s232 + $0x38] sm:$0xff] %v247
                %v249 = vld [vmem:[%s231 + $0xd0] sm:$0xff]
                %250 = vst [vmem:[%s232 + $0x40] sm:$0xff] %v249
                %v251 = vld [vmem:[%s231 + $0x120] sm:$0xff]
                %252 = vst [vmem:[%s232 + $0x48] sm:$0xff] %v251
                %v253 = vld [vmem:[%s231 + $0x128] sm:$0xff]
                %254 = vst [vmem:[%s232 + $0x50] sm:$0xff] %v253
                %v255 = vld [vmem:[%s231 + $0x130] sm:$0xff]
                %256 = vst [vmem:[%s232 + $0x58] sm:$0xff] %v255
                %v257 = vld [vmem:[%s231 + $0x180] sm:$0xff]
                %258 = vst [vmem:[%s232 + $0x60] sm:$0xff] %v257
                %v259 = vld [vmem:[%s231 + $0x188] sm:$0xff]
                %260 = vst [vmem:[%s232 + $0x68] sm:$0xff] %v259
                %v261 = vld [vmem:[%s231 + $0x190] sm:$0xff]
                %262 = vst [vmem:[%s232 + $0x70] sm:$0xff] %v261
                %v263 = vld [vmem:[%s231 + $0x1e0] sm:$0xff]
                %264 = vst [vmem:[%s232 + $0x78] sm:$0xff] %v263
                %v265 = vld [vmem:[%s231 + $0x1e8] sm:$0xff]
                %266 = vst [vmem:[%s232 + $0x80] sm:$0xff] %v265
                %v267 = vld [vmem:[%s231 + $0x1f0] sm:$0xff]
                %268 = vst [vmem:[%s232 + $0x88] sm:$0xff] %v267
                %v269 = vld [vmem:[%s231 + $0x240] sm:$0xff]
                %270 = vst [vmem:[%s232 + $0x90] sm:$0xff] %v269
                %v271 = vld [vmem:[%s231 + $0x248] sm:$0xff]
                %272 = vst [vmem:[%s232 + $0x98] sm:$0xff] %v271
                %v273 = vld [vmem:[%s231 + $0x250] sm:$0xff]
                %274 = vst [vmem:[%s232 + $0xa0] sm:$0xff] %v273
              $region37: #{fused_forward.1} parent=31 // loop_footer
                %s230 = sadd.s32 1, %s226
              $region38: #{fused_forward.1} parent=31 // loop_footer_branch
                %225 = sbr.rel target = $region34
              $region39: #{fused_forward.1} parent=31 // loop_exit
                _
            $region32: #{fused_forward.1} parent=27 // pred_fallthru
              _
            // Predicated region
            $region40: #{fused_forward.1} parent=27 // pred_check
              _
            $region41: #{fused_forward.1} parent=27 // pred_check_branch
              %276 = sbr.rel target = $region43
            $region42: #{fused_forward.1} parent=27 // pred_region
              _
            $region43: #{fused_forward.1} parent=27 // pred_fallthru
              _
          $region28: #{fused_forward.1} parent=23 // pred_fallthru
            _
          %277 = vnop
        $region24: #{fused_forward.1} parent=15 // pred_fallthru
          _
        // Predicated region
        $region44: #{fused_forward.1} parent=15 // pred_check
          %p278 = pneg %p100
        $region45: #{fused_forward.1} parent=15 // pred_check_branch
          %280 = sbr.rel (%p278) target = $region47
        $region46: #{fused_forward.1} parent=15 // pred_region
          %s281 = sand.u32 %s90, 1
          %s282 = scalar_lea.sflag [#allocation5], %s281
          %s283 = sand.u32 %s90, 1
          %s284 = smul.addr %s283, 768
          %s285 = scalar_lea.vmem [#allocation4], %s284
          %s286 = smul.u32 96, %s22
          %s287 = smul.u32 2, %s21
          %289 = vsyncadd %s282, 0
          %s290 = smul.addr %s286, 4
          %s291 = sadd.s32 %s287, %s290
          %s292 = smul.addr %s291, 4
          %s293 = scalar_lea.hbm %s2, %s292
          %s294 = sshll.u32 %s293, 4
          %s295 = int_to_ptr.hbm [resolvable:$true] %s294
          %s296 = sshll.u32 %s285, 4
          %s297 = int_to_ptr.vmem [resolvable:$true] %s296
          %302 = dma.hbm_to_vmem [thread:$0]  %s295, 12288, %s297, %s282, 256, 128, 8
        $region47: #{fused_forward.1} parent=15 // pred_fallthru
          _
        // Predicated region
        $region48: #{fused_forward.1} parent=15 // pred_check
          %p303 = pneg %p126
        $region49: #{fused_forward.1} parent=15 // pred_check_branch
          %305 = sbr.rel (%p303) target = $region51
        $region50: #{fused_forward.1} parent=15 // pred_region
          %s306 = smul.u32 2, %s21
          %p307 = scmp.lt.s32.totalorder %s306, 3
          %s308 = scalar_select %p307, %s306, 3
          %s309 = scalar_lea.vmem %s3, %s308
          %s310 = smul.u32 2, %s21
        $region51: #{fused_forward.1} parent=15 // pred_fallthru
          _
        // Predicated region
        $region52: #{fused_forward.1} parent=15 // pred_check
          %p311 = pneg %p152
        $region53: #{fused_forward.1} parent=15 // pred_check_branch
          %313 = sbr.rel (%p311) target = $region55
        $region54: #{fused_forward.1} parent=15 // pred_region
          %s314 = smul.u32 2, %s21
          %p315 = scmp.lt.s32.totalorder %s314, 3
          %s316 = scalar_select %p315, %s314, 3
          %s317 = scalar_lea.vmem %s4, %s316
          %s318 = smul.u32 2, %s21
        $region55: #{fused_forward.1} parent=15 // pred_fallthru
          _
      $region16: #{fused_forward.1} parent=5 // pred_fallthru
        _
      %p319 = scmp.le.s32.totalorder 1, %s14
      %p320 = scmp.lt.s32.totalorder %s14, 9
      %p321 = pnand %p319, %p320
      %p322 = pneg %p321
      // Predicated region
      $region56: #{fused_forward.1} parent=5 // pred_check
        _
      $region57: #{fused_forward.1} parent=5 // pred_check_branch
        %324 = sbr.rel (%p321) target = $region59
      $region58: #{fused_forward.1} parent=5 // pred_region
        %s325 = ssub.s32 %s14, 1
        %s326 = sand.u32 %s65, 1
        %s327 = sand.u32 %s65, 1
        %s328 = smul.addr %s327, 168
        %s329 = scalar_lea.vmem [#allocation3], %s328
        // Predicated region
        $region60: #{fused_forward.1} parent=58 // pred_check
          %p330 = pneg %p78
        $region61: #{fused_forward.1} parent=58 // pred_check_branch
          %332 = sbr.rel (%p330) target = $region63
        $region62: #{fused_forward.1} parent=58 // pred_region
          _
        $region63: #{fused_forward.1} parent=58 // pred_fallthru
          _
        %s333 = sand.u32 %s93, 1
        %s334 = scalar_lea.sflag [#allocation5], %s333
        %s335 = sand.u32 %s93, 1
        %s336 = smul.addr %s335, 768
        %s337 = scalar_lea.vmem [#allocation4], %s336
        // Predicated region
        $region64: #{fused_forward.1} parent=58 // pred_check
          %p338 = pneg %p106
        $region65: #{fused_forward.1} parent=58 // pred_check_branch
          %340 = sbr.rel (%p338) target = $region67
        $region66: #{fused_forward.1} parent=58 // pred_region
          %342 = dma.done %s334, 12288
        $region67: #{fused_forward.1} parent=58 // pred_fallthru
          _
        %s343 = smul.u32 6, %s24
        %p344 = scmp.lt.s32.totalorder %s343, 23
        %s345 = scalar_select %p344, %s343, 23
        %s346 = scalar_lea.vmem %s0, %s345
        %p347 = pneg %p52
        %p348 = pneg %p49
        %s349 = sand.u32 %s65, 1
        %s350 = sand.u32 %s65, 1
        %s351 = smul.addr %s350, 168
        %s352 = scalar_lea.vmem [#allocation3], %s351
        %p353 = pneg %p78
        %p354 = pneg %p75
        %s355 = sand.u32 %s93, 1
        %s356 = scalar_lea.sflag [#allocation5], %s355
        %s357 = sand.u32 %s93, 1
        %s358 = smul.addr %s357, 768
        %s359 = scalar_lea.vmem [#allocation4], %s358
        %p360 = pneg %p106
        %p361 = pneg %p103
        %s362 = smul.u32 2, %s23
        %p363 = scmp.lt.s32.totalorder %s362, 3
        %s364 = scalar_select %p363, %s362, 3
        %s365 = scalar_lea.vmem %s3, %s364
        %p366 = pneg %p132
        %p367 = pneg %p129
        %s368 = smul.u32 2, %s23
        %p369 = scmp.lt.s32.totalorder %s368, 3
        %s370 = scalar_select %p369, %s368, 3
        %s371 = scalar_lea.vmem %s4, %s370
        %p372 = pneg %p158
        %p373 = pneg %p155
        %p374 = pneg %p184
        %p375 = pneg %p181
        %s376 = sand.u32 %s171, 1
        %s377 = sand.u32 %s171, 1
        %s378 = smul.addr %s377, 112
        %s379 = scalar_lea.vmem [#allocation6], %s378
        %s380 = smul.u32 6, %s24
        %p381 = scmp.lt.s32.totalorder %s380, 23
        %s382 = scalar_select %p381, %s380, 23
        %s383 = scalar_lea.vmem %s0, %s382
        %s384 = smul.u32 6, %s24
        %s385 = smul.u32 6, %s24
        %s386 = smul.u32 96, %s24
        %s387 = smul.u32 2, %s23
        %s388 = smul.u32 2, %s23
        %p389 = scmp.lt.s32.totalorder %s388, 3
        %s390 = scalar_select %p389, %s388, 3
        %s391 = scalar_lea.vmem %s3, %s390
        %s392 = smul.u32 2, %s23
        %s393 = smul.u32 2, %s23
        %p394 = scmp.lt.s32.totalorder %s393, 3
        %s395 = scalar_select %p394, %s393, 3
        %s396 = scalar_lea.vmem %s4, %s395
        %s397 = smul.u32 2, %s23
        %s398 = smul.u32 2, %s23
        %p399 = scmp.eq.s32.totalorder %s24, 0
        // Predicated region
        $region68: #{fused_forward.1} parent=58 // pred_check
          %p400 = pneg %p399
        $region69: #{fused_forward.1} parent=58 // pred_check_branch
          %402 = sbr.rel (%p400) target = $region71
        $region70: #{fused_forward.1} parent=58 // pred_region
          %403 = vst [vmem:[#allocation2] sm:$0xff] 0.0
          %404 = vst [vmem:[#allocation2 + $0x8] sm:$0xff] 0.0
          %405 = vst [vmem:[#allocation2 + $0x10] sm:$0xff] 0.0
          %406 = vst [vmem:[#allocation2 + $0x18] sm:$0xff] 0.0
          %407 = vst [vmem:[#allocation2 + $0x20] sm:$0xff] 0.0
          %408 = vst [vmem:[#allocation2 + $0x28] sm:$0xff] 0.0
          %409 = vst [vmem:[#allocation2 + $0x30] sm:$0xff] 0.0
          %410 = vst [vmem:[#allocation2 + $0x38] sm:$0xff] 0.0
          %411 = vst [vmem:[#allocation2 + $0x40] sm:$0xff] 0.0
          %412 = vst [vmem:[#allocation2 + $0x48] sm:$0xff] 0.0
          %413 = vst [vmem:[#allocation2 + $0x50] sm:$0xff] 0.0
          %414 = vst [vmem:[#allocation2 + $0x58] sm:$0xff] 0.0
          %415 = vst [vmem:[#allocation2 + $0x60] sm:$0x1] 0.0
          %416 = vst [vmem:[#allocation2 + $0x68] sm:$0x1] 0.0
        $region71: #{fused_forward.1} parent=58 // pred_fallthru
          _
        %v417 = vld [vmem:[%s329] sm:$0xff]
        %v418 = vld [vmem:[%s329 + $0x8] sm:$0xff]
        %v419 = vld [vmem:[%s329 + $0x10] sm:$0xff]
        %v420 = vld [vmem:[%s329 + $0x18] sm:$0xff]
        %v421 = vld [vmem:[%s329 + $0x20] sm:$0xff]
        %v422 = vld [vmem:[%s329 + $0x28] sm:$0xff]
        %v423 = vld [vmem:[%s329 + $0x30] sm:$0xff]
        %v424 = vld [vmem:[%s329 + $0x38] sm:$0xff]
        %v425 = vld [vmem:[%s329 + $0x40] sm:$0xff]
        %v426 = vld [vmem:[%s329 + $0x48] sm:$0xff]
        %v427 = vld [vmem:[%s329 + $0x50] sm:$0xff]
        %v428 = vld [vmem:[%s329 + $0x58] sm:$0xff]
        %v429 = vld [vmem:[%s329 + $0x60] sm:$0xff]
        %v430 = vld [vmem:[%s329 + $0x68] sm:$0xff]
        %v431 = vld [vmem:[%s329 + $0x70] sm:$0xff]
        %v432 = vld [vmem:[%s329 + $0x78] sm:$0xff]
        %v433 = vld [vmem:[%s329 + $0x80] sm:$0xff]
        %v434 = vld [vmem:[%s329 + $0x88] sm:$0xff]
        %v435 = vld [vmem:[%s329 + $0x90] sm:$0x11]
        %v436 = vld [vmem:[%s329 + $0x98] sm:$0x11]
        %v437 = vld [vmem:[%s329 + $0xa0] sm:$0x11]
        %v438 = vunpack.c.l.bf16 %v417
        %v439 = vunpack.c.h.bf16 %v417
        %v440 = vunpack.c.l.bf16 %v418
        %v441 = vunpack.c.h.bf16 %v418
        %v442 = vunpack.c.l.bf16 %v419
        %v443 = vunpack.c.h.bf16 %v419
        %v444 = vunpack.c.l.bf16 %v420
        %v445 = vunpack.c.h.bf16 %v420
        %v446 = vunpack.c.l.bf16 %v421
        %v447 = vunpack.c.h.bf16 %v421
        %v448 = vunpack.c.l.bf16 %v422
        %v449 = vunpack.c.h.bf16 %v422
        %v450 = vunpack.c.l.bf16 %v423
        %v451 = vunpack.c.h.bf16 %v423
        %v452 = vunpack.c.l.bf16 %v424
        %v453 = vunpack.c.h.bf16 %v424
        %v454 = vunpack.c.l.bf16 %v425
        %v455 = vunpack.c.h.bf16 %v425
        %v456 = vunpack.c.l.bf16 %v426
        %v457 = vunpack.c.h.bf16 %v426
        %v458 = vunpack.c.l.bf16 %v427
        %v459 = vunpack.c.h.bf16 %v427
        %v460 = vunpack.c.l.bf16 %v428
        %v461 = vunpack.c.h.bf16 %v428
        %v462 = vunpack.c.l.bf16 %v429
        %v463 = vunpack.c.h.bf16 %v429
        %v464 = vunpack.c.l.bf16 %v430
        %v465 = vunpack.c.h.bf16 %v430
        %v466 = vunpack.c.l.bf16 %v431
        %v467 = vunpack.c.h.bf16 %v431
        %v468 = vunpack.c.l.bf16 %v432
        %v469 = vunpack.c.h.bf16 %v432
        %v470 = vunpack.c.l.bf16 %v433
        %v471 = vunpack.c.h.bf16 %v433
        %v472 = vunpack.c.l.bf16 %v434
        %v473 = vunpack.c.h.bf16 %v434
        %v474 = vunpack.c.l.bf16 %v435
        %v475 = vunpack.c.h.bf16 %v435
        %v476 = vunpack.c.l.bf16 %v436
        %v477 = vunpack.c.h.bf16 %v436
        %v478 = vunpack.c.l.bf16 %v437
        %v479 = vunpack.c.h.bf16 %v437
        %v480 = vld [vmem:[%s383] sm:$0x3f]
        %v482 = vperm.slane %v480, 0
        %v483 = vperm.slane %v480, 1
        %v484 = vperm.slane %v480, 2
        %v485 = vperm.slane %v480, 3
        %v486 = vperm.slane %v480, 4
        %v487 = vperm.slane %v480, 5
        %v494 = vmul.f32 %v438, %v482
        %v495 = vmul.f32 %v439, %v483
        %v496 = vmul.f32 %v440, %v484
        %v497 = vmul.f32 %v441, %v485
        %v498 = vmul.f32 %v442, %v486
        %v499 = vmul.f32 %v443, %v487
        %v500 = vmul.f32 %v444, %v482
        %v501 = vmul.f32 %v445, %v483
        %v502 = vmul.f32 %v446, %v484
        %v503 = vmul.f32 %v447, %v485
        %v504 = vmul.f32 %v448, %v486
        %v505 = vmul.f32 %v449, %v487
        %v506 = vmul.f32 %v450, %v482
        %v507 = vmul.f32 %v451, %v483
        %v508 = vmul.f32 %v452, %v484
        %v509 = vmul.f32 %v453, %v485
        %v510 = vmul.f32 %v454, %v486
        %v511 = vmul.f32 %v455, %v487
        %v512 = vmul.f32 %v456, %v482
        %v513 = vmul.f32 %v457, %v483
        %v514 = vmul.f32 %v458, %v484
        %v515 = vmul.f32 %v459, %v485
        %v516 = vmul.f32 %v460, %v486
        %v517 = vmul.f32 %v461, %v487
        %v518 = vmul.f32 %v462, %v482
        %v519 = vmul.f32 %v463, %v483
        %v520 = vmul.f32 %v464, %v484
        %v521 = vmul.f32 %v465, %v485
        %v522 = vmul.f32 %v466, %v486
        %v523 = vmul.f32 %v467, %v487
        %v524 = vmul.f32 %v468, %v482
        %v525 = vmul.f32 %v469, %v483
        %v526 = vmul.f32 %v470, %v484
        %v527 = vmul.f32 %v471, %v485
        %v528 = vmul.f32 %v472, %v486
        %v529 = vmul.f32 %v473, %v487
        %v530 = vmul.f32 %v474, %v482
        %v531 = vmul.f32 %v475, %v483
        %v532 = vmul.f32 %v476, %v484
        %v533 = vmul.f32 %v477, %v485
        %v534 = vmul.f32 %v478, %v486
        %v535 = vmul.f32 %v479, %v487
        %v536 = vpack.c.bf16 %v500, %v494
        %v537 = vpack.c.bf16 %v501, %v495
        %v538 = vpack.c.bf16 %v502, %v496
        %v539 = vpack.c.bf16 %v503, %v497
        %v540 = vpack.c.bf16 %v504, %v498
        %v541 = vpack.c.bf16 %v505, %v499
        %v542 = vpack.c.bf16 %v512, %v506
        %v543 = vpack.c.bf16 %v513, %v507
        %v544 = vpack.c.bf16 %v514, %v508
        %v545 = vpack.c.bf16 %v515, %v509
        %v546 = vpack.c.bf16 %v516, %v510
        %v547 = vpack.c.bf16 %v517, %v511
        %v548 = vpack.c.bf16 %v524, %v518
        %v549 = vpack.c.bf16 %v525, %v519
        %v550 = vpack.c.bf16 %v526, %v520
        %v551 = vpack.c.bf16 %v527, %v521
        %v552 = vpack.c.bf16 %v528, %v522
        %v553 = vpack.c.bf16 %v529, %v523
        %v554 = vpack.c.bf16 %v530, %v530
        %v555 = vpack.c.bf16 %v531, %v531
        %v556 = vpack.c.bf16 %v532, %v532
        %v557 = vpack.c.bf16 %v533, %v533
        %v558 = vpack.c.bf16 %v534, %v534
        %v559 = vpack.c.bf16 %v535, %v535
        %v560 = vld [vmem:[#allocation2] sm:$0xff]
        %v561 = vld [vmem:[#allocation2 + $0x8] sm:$0xff]
        %v562 = vld [vmem:[#allocation2 + $0x10] sm:$0xff]
        %v563 = vld [vmem:[#allocation2 + $0x18] sm:$0xff]
        %v564 = vld [vmem:[#allocation2 + $0x20] sm:$0xff]
        %v565 = vld [vmem:[#allocation2 + $0x28] sm:$0xff]
        %v566 = vld [vmem:[#allocation2 + $0x30] sm:$0xff]
        %v567 = vld [vmem:[#allocation2 + $0x38] sm:$0xff]
        %v568 = vld [vmem:[#allocation2 + $0x40] sm:$0xff]
        %v569 = vld [vmem:[#allocation2 + $0x48] sm:$0xff]
        %v570 = vld [vmem:[#allocation2 + $0x50] sm:$0xff]
        %v571 = vld [vmem:[#allocation2 + $0x58] sm:$0xff]
        %v572 = vld [vmem:[#allocation2 + $0x60] sm:$0x1]
        %v573 = vld [vmem:[#allocation2 + $0x68] sm:$0x1]
        %v574 = vld [vmem:[%s337] sm:$0xff]
        %v575 = vld [vmem:[%s337 + $0x8] sm:$0xff]
        %v576 = vld [vmem:[%s337 + $0x10] sm:$0xff]
        %v577 = vld [vmem:[%s337 + $0x18] sm:$0xff]
        %v578 = vld [vmem:[%s337 + $0x20] sm:$0xff]
        %v579 = vld [vmem:[%s337 + $0x28] sm:$0xff]
        %v580 = vld [vmem:[%s337 + $0x30] sm:$0xff]
        %v581 = vld [vmem:[%s337 + $0x38] sm:$0xff]
        %v582 = vld [vmem:[%s337 + $0x40] sm:$0xff]
        %v583 = vld [vmem:[%s337 + $0x48] sm:$0xff]
        %v584 = vld [vmem:[%s337 + $0x50] sm:$0xff]
        %v585 = vld [vmem:[%s337 + $0x58] sm:$0xff]
        %v586 = vld [vmem:[%s337 + $0x60] sm:$0xff]
        %v587 = vld [vmem:[%s337 + $0x68] sm:$0xff]
        %v588 = vld [vmem:[%s337 + $0x70] sm:$0xff]
        %v589 = vld [vmem:[%s337 + $0x78] sm:$0xff]
        %v590 = vld [vmem:[%s337 + $0x80] sm:$0xff]
        %v591 = vld [vmem:[%s337 + $0x88] sm:$0xff]
        %v592 = vld [vmem:[%s337 + $0x90] sm:$0xff]
        %v593 = vld [vmem:[%s337 + $0x98] sm:$0xff]
        %v594 = vld [vmem:[%s337 + $0xa0] sm:$0xff]
        %v595 = vld [vmem:[%s337 + $0xa8] sm:$0xff]
        %v596 = vld [vmem:[%s337 + $0xb0] sm:$0xff]
        %v597 = vld [vmem:[%s337 + $0xb8] sm:$0xff]
        %v598 = vld [vmem:[%s337 + $0xc0] sm:$0xff]
        %v599 = vld [vmem:[%s337 + $0xc8] sm:$0xff]
        %v600 = vld [vmem:[%s337 + $0xd0] sm:$0xff]
        %v601 = vld [vmem:[%s337 + $0xd8] sm:$0xff]
        %v602 = vld [vmem:[%s337 + $0xe0] sm:$0xff]
        %v603 = vld [vmem:[%s337 + $0xe8] sm:$0xff]
        %v604 = vld [vmem:[%s337 + $0xf0] sm:$0xff]
        %v605 = vld [vmem:[%s337 + $0xf8] sm:$0xff]
        %v606 = vld [vmem:[%s337 + $0x100] sm:$0xff]
        %v607 = vld [vmem:[%s337 + $0x108] sm:$0xff]
        %v608 = vld [vmem:[%s337 + $0x110] sm:$0xff]
        %v609 = vld [vmem:[%s337 + $0x118] sm:$0xff]
        %v610 = vld [vmem:[%s337 + $0x120] sm:$0xff]
        %v611 = vld [vmem:[%s337 + $0x128] sm:$0xff]
        %v612 = vld [vmem:[%s337 + $0x130] sm:$0xff]
        %v613 = vld [vmem:[%s337 + $0x138] sm:$0xff]
        %v614 = vld [vmem:[%s337 + $0x140] sm:$0xff]
        %v615 = vld [vmem:[%s337 + $0x148] sm:$0xff]
        %v616 = vld [vmem:[%s337 + $0x150] sm:$0xff]
        %v617 = vld [vmem:[%s337 + $0x158] sm:$0xff]
        %v618 = vld [vmem:[%s337 + $0x160] sm:$0xff]
        %v619 = vld [vmem:[%s337 + $0x168] sm:$0xff]
        %v620 = vld [vmem:[%s337 + $0x170] sm:$0xff]
        %v621 = vld [vmem:[%s337 + $0x178] sm:$0xff]
        %v622 = vld [vmem:[%s337 + $0x180] sm:$0xff]
        %v623 = vld [vmem:[%s337 + $0x188] sm:$0xff]
        %v624 = vld [vmem:[%s337 + $0x190] sm:$0xff]
        %v625 = vld [vmem:[%s337 + $0x198] sm:$0xff]
        %v626 = vld [vmem:[%s337 + $0x1a0] sm:$0xff]
        %v627 = vld [vmem:[%s337 + $0x1a8] sm:$0xff]
        %v628 = vld [vmem:[%s337 + $0x1b0] sm:$0xff]
        %v629 = vld [vmem:[%s337 + $0x1b8] sm:$0xff]
        %v630 = vld [vmem:[%s337 + $0x1c0] sm:$0xff]
        %v631 = vld [vmem:[%s337 + $0x1c8] sm:$0xff]
        %v632 = vld [vmem:[%s337 + $0x1d0] sm:$0xff]
        %v633 = vld [vmem:[%s337 + $0x1d8] sm:$0xff]
        %v634 = vld [vmem:[%s337 + $0x1e0] sm:$0xff]
        %v635 = vld [vmem:[%s337 + $0x1e8] sm:$0xff]
        %v636 = vld [vmem:[%s337 + $0x1f0] sm:$0xff]
        %v637 = vld [vmem:[%s337 + $0x1f8] sm:$0xff]
        %v638 = vld [vmem:[%s337 + $0x200] sm:$0xff]
        %v639 = vld [vmem:[%s337 + $0x208] sm:$0xff]
        %v640 = vld [vmem:[%s337 + $0x210] sm:$0xff]
        %v641 = vld [vmem:[%s337 + $0x218] sm:$0xff]
        %v642 = vld [vmem:[%s337 + $0x220] sm:$0xff]
        %v643 = vld [vmem:[%s337 + $0x228] sm:$0xff]
        %v644 = vld [vmem:[%s337 + $0x230] sm:$0xff]
        %v645 = vld [vmem:[%s337 + $0x238] sm:$0xff]
        %v646 = vld [vmem:[%s337 + $0x240] sm:$0xff]
        %v647 = vld [vmem:[%s337 + $0x248] sm:$0xff]
        %v648 = vld [vmem:[%s337 + $0x250] sm:$0xff]
        %v649 = vld [vmem:[%s337 + $0x258] sm:$0xff]
        %v650 = vld [vmem:[%s337 + $0x260] sm:$0xff]
        %v651 = vld [vmem:[%s337 + $0x268] sm:$0xff]
        %v652 = vld [vmem:[%s337 + $0x270] sm:$0xff]
        %v653 = vld [vmem:[%s337 + $0x278] sm:$0xff]
        %v654 = vld [vmem:[%s337 + $0x280] sm:$0xff]
        %v655 = vld [vmem:[%s337 + $0x288] sm:$0xff]
        %v656 = vld [vmem:[%s337 + $0x290] sm:$0xff]
        %v657 = vld [vmem:[%s337 + $0x298] sm:$0xff]
        %v658 = vld [vmem:[%s337 + $0x2a0] sm:$0xff]
        %v659 = vld [vmem:[%s337 + $0x2a8] sm:$0xff]
        %v660 = vld [vmem:[%s337 + $0x2b0] sm:$0xff]
        %v661 = vld [vmem:[%s337 + $0x2b8] sm:$0xff]
        %v662 = vld [vmem:[%s337 + $0x2c0] sm:$0xff]
        %v663 = vld [vmem:[%s337 + $0x2c8] sm:$0xff]
        %v664 = vld [vmem:[%s337 + $0x2d0] sm:$0xff]
        %v665 = vld [vmem:[%s337 + $0x2d8] sm:$0xff]
        %v666 = vld [vmem:[%s337 + $0x2e0] sm:$0xff]
        %v667 = vld [vmem:[%s337 + $0x2e8] sm:$0xff]
        %v668 = vld [vmem:[%s337 + $0x2f0] sm:$0xff]
        %v669 = vld [vmem:[%s337 + $0x2f8] sm:$0xff]
        %v766 = vunpack.c.l.b16 %v574
        %v767 = vunpack.c.h.b16 %v574
        %v768 = vunpack.c.l.b16 %v575
        %v769 = vunpack.c.h.b16 %v575
        %v770 = vunpack.c.l.b16 %v576
        %v771 = vunpack.c.h.b16 %v576
        %v772 = vunpack.c.l.b16 %v577
        %v773 = vunpack.c.h.b16 %v577
        %v774 = vunpack.c.l.b16 %v578
        %v775 = vunpack.c.h.b16 %v578
        %v776 = vunpack.c.l.b16 %v579
        %v777 = vunpack.c.h.b16 %v579
        %v778 = vunpack.c.l.b16 %v580
        %v779 = vunpack.c.h.b16 %v580
        %v780 = vunpack.c.l.b16 %v581
        %v781 = vunpack.c.h.b16 %v581
        %v782 = vunpack.c.l.b16 %v582
        %v783 = vunpack.c.h.b16 %v582
        %v784 = vunpack.c.l.b16 %v583
        %v785 = vunpack.c.h.b16 %v583
        %v786 = vunpack.c.l.b16 %v584
        %v787 = vunpack.c.h.b16 %v584
        %v788 = vunpack.c.l.b16 %v585
        %v789 = vunpack.c.h.b16 %v585
        %v790 = vunpack.c.l.b16 %v586
        %v791 = vunpack.c.h.b16 %v586
        %v792 = vunpack.c.l.b16 %v587
        %v793 = vunpack.c.h.b16 %v587
        %v794 = vunpack.c.l.b16 %v588
        %v795 = vunpack.c.h.b16 %v588
        %v796 = vunpack.c.l.b16 %v589
        %v797 = vunpack.c.h.b16 %v589
        %v798 = vunpack.c.l.b16 %v590
        %v799 = vunpack.c.h.b16 %v590
        %v800 = vunpack.c.l.b16 %v591
        %v801 = vunpack.c.h.b16 %v591
        %v802 = vunpack.c.l.b16 %v592
        %v803 = vunpack.c.h.b16 %v592
        %v804 = vunpack.c.l.b16 %v593
        %v805 = vunpack.c.h.b16 %v593
        %v806 = vunpack.c.l.b16 %v594
        %v807 = vunpack.c.h.b16 %v594
        %v808 = vunpack.c.l.b16 %v595
        %v809 = vunpack.c.h.b16 %v595
        %v810 = vunpack.c.l.b16 %v596
        %v811 = vunpack.c.h.b16 %v596
        %v812 = vunpack.c.l.b16 %v597
        %v813 = vunpack.c.h.b16 %v597
        %v814 = vunpack.c.l.b16 %v598
        %v815 = vunpack.c.h.b16 %v598
        %v816 = vunpack.c.l.b16 %v599
        %v817 = vunpack.c.h.b16 %v599
        %v818 = vunpack.c.l.b16 %v600
        %v819 = vunpack.c.h.b16 %v600
        %v820 = vunpack.c.l.b16 %v601
        %v821 = vunpack.c.h.b16 %v601
        %v822 = vunpack.c.l.b16 %v602
        %v823 = vunpack.c.h.b16 %v602
        %v824 = vunpack.c.l.b16 %v603
        %v825 = vunpack.c.h.b16 %v603
        %v826 = vunpack.c.l.b16 %v604
        %v827 = vunpack.c.h.b16 %v604
        %v828 = vunpack.c.l.b16 %v605
        %v829 = vunpack.c.h.b16 %v605
        %v830 = vunpack.c.l.b16 %v606
        %v831 = vunpack.c.h.b16 %v606
        %v832 = vunpack.c.l.b16 %v607
        %v833 = vunpack.c.h.b16 %v607
        %v834 = vunpack.c.l.b16 %v608
        %v835 = vunpack.c.h.b16 %v608
        %v836 = vunpack.c.l.b16 %v609
        %v837 = vunpack.c.h.b16 %v609
        %v838 = vunpack.c.l.b16 %v610
        %v839 = vunpack.c.h.b16 %v610
        %v840 = vunpack.c.l.b16 %v611
        %v841 = vunpack.c.h.b16 %v611
        %v842 = vunpack.c.l.b16 %v612
        %v843 = vunpack.c.h.b16 %v612
        %v844 = vunpack.c.l.b16 %v613
        %v845 = vunpack.c.h.b16 %v613
        %v846 = vunpack.c.l.b16 %v614
        %v847 = vunpack.c.h.b16 %v614
        %v848 = vunpack.c.l.b16 %v615
        %v849 = vunpack.c.h.b16 %v615
        %v850 = vunpack.c.l.b16 %v616
        %v851 = vunpack.c.h.b16 %v616
        %v852 = vunpack.c.l.b16 %v617
        %v853 = vunpack.c.h.b16 %v617
        %v854 = vunpack.c.l.b16 %v618
        %v855 = vunpack.c.h.b16 %v618
        %v856 = vunpack.c.l.b16 %v619
        %v857 = vunpack.c.h.b16 %v619
        %v858 = vunpack.c.l.b16 %v620
        %v859 = vunpack.c.h.b16 %v620
        %v860 = vunpack.c.l.b16 %v621
        %v861 = vunpack.c.h.b16 %v621
        %v862 = vunpack.c.l.b16 %v622
        %v863 = vunpack.c.h.b16 %v622
        %v864 = vunpack.c.l.b16 %v623
        %v865 = vunpack.c.h.b16 %v623
        %v866 = vunpack.c.l.b16 %v624
        %v867 = vunpack.c.h.b16 %v624
        %v868 = vunpack.c.l.b16 %v625
        %v869 = vunpack.c.h.b16 %v625
        %v870 = vunpack.c.l.b16 %v626
        %v871 = vunpack.c.h.b16 %v626
        %v872 = vunpack.c.l.b16 %v627
        %v873 = vunpack.c.h.b16 %v627
        %v874 = vunpack.c.l.b16 %v628
        %v875 = vunpack.c.h.b16 %v628
        %v876 = vunpack.c.l.b16 %v629
        %v877 = vunpack.c.h.b16 %v629
        %v878 = vunpack.c.l.b16 %v630
        %v879 = vunpack.c.h.b16 %v630
        %v880 = vunpack.c.l.b16 %v631
        %v881 = vunpack.c.h.b16 %v631
        %v882 = vunpack.c.l.b16 %v632
        %v883 = vunpack.c.h.b16 %v632
        %v884 = vunpack.c.l.b16 %v633
        %v885 = vunpack.c.h.b16 %v633
        %v886 = vunpack.c.l.b16 %v634
        %v887 = vunpack.c.h.b16 %v634
        %v888 = vunpack.c.l.b16 %v635
        %v889 = vunpack.c.h.b16 %v635
        %v890 = vunpack.c.l.b16 %v636
        %v891 = vunpack.c.h.b16 %v636
        %v892 = vunpack.c.l.b16 %v637
        %v893 = vunpack.c.h.b16 %v637
        %v894 = vunpack.c.l.b16 %v638
        %v895 = vunpack.c.h.b16 %v638
        %v896 = vunpack.c.l.b16 %v639
        %v897 = vunpack.c.h.b16 %v639
        %v898 = vunpack.c.l.b16 %v640
        %v899 = vunpack.c.h.b16 %v640
        %v900 = vunpack.c.l.b16 %v641
        %v901 = vunpack.c.h.b16 %v641
        %v902 = vunpack.c.l.b16 %v642
        %v903 = vunpack.c.h.b16 %v642
        %v904 = vunpack.c.l.b16 %v643
        %v905 = vunpack.c.h.b16 %v643
        %v906 = vunpack.c.l.b16 %v644
        %v907 = vunpack.c.h.b16 %v644
        %v908 = vunpack.c.l.b16 %v645
        %v909 = vunpack.c.h.b16 %v645
        %v910 = vunpack.c.l.b16 %v646
        %v911 = vunpack.c.h.b16 %v646
        %v912 = vunpack.c.l.b16 %v647
        %v913 = vunpack.c.h.b16 %v647
        %v914 = vunpack.c.l.b16 %v648
        %v915 = vunpack.c.h.b16 %v648
        %v916 = vunpack.c.l.b16 %v649
        %v917 = vunpack.c.h.b16 %v649
        %v918 = vunpack.c.l.b16 %v650
        %v919 = vunpack.c.h.b16 %v650
        %v920 = vunpack.c.l.b16 %v651
        %v921 = vunpack.c.h.b16 %v651
        %v922 = vunpack.c.l.b16 %v652
        %v923 = vunpack.c.h.b16 %v652
        %v924 = vunpack.c.l.b16 %v653
        %v925 = vunpack.c.h.b16 %v653
        %v926 = vunpack.c.l.b16 %v654
        %v927 = vunpack.c.h.b16 %v654
        %v928 = vunpack.c.l.b16 %v655
        %v929 = vunpack.c.h.b16 %v655
        %v930 = vunpack.c.l.b16 %v656
        %v931 = vunpack.c.h.b16 %v656
        %v932 = vunpack.c.l.b16 %v657
        %v933 = vunpack.c.h.b16 %v657
        %v934 = vunpack.c.l.b16 %v658
        %v935 = vunpack.c.h.b16 %v658
        %v936 = vunpack.c.l.b16 %v659
        %v937 = vunpack.c.h.b16 %v659
        %v938 = vunpack.c.l.b16 %v660
        %v939 = vunpack.c.h.b16 %v660
        %v940 = vunpack.c.l.b16 %v661
        %v941 = vunpack.c.h.b16 %v661
        %v942 = vunpack.c.l.b16 %v662
        %v943 = vunpack.c.h.b16 %v662
        %v944 = vunpack.c.l.b16 %v663
        %v945 = vunpack.c.h.b16 %v663
        %v946 = vunpack.c.l.b16 %v664
        %v947 = vunpack.c.h.b16 %v664
        %v948 = vunpack.c.l.b16 %v665
        %v949 = vunpack.c.h.b16 %v665
        %v950 = vunpack.c.l.b16 %v666
        %v951 = vunpack.c.h.b16 %v666
        %v952 = vunpack.c.l.b16 %v667
        %v953 = vunpack.c.h.b16 %v667
        %v954 = vunpack.c.l.b16 %v668
        %v955 = vunpack.c.h.b16 %v668
        %v956 = vunpack.c.l.b16 %v669
        %v957 = vunpack.c.h.b16 %v669
        %v958 = vpack.c.b16 %v768, %v766
        %v959 = vpack.c.b16 %v769, %v767
        %v960 = vpack.c.b16 %v772, %v770
        %v961 = vpack.c.b16 %v773, %v771
        %v962 = vpack.c.b16 %v776, %v774
        %v963 = vpack.c.b16 %v777, %v775
        %v964 = vpack.c.b16 %v780, %v778
        %v965 = vpack.c.b16 %v781, %v779
        %v966 = vpack.c.b16 %v784, %v782
        %v967 = vpack.c.b16 %v785, %v783
        %v968 = vpack.c.b16 %v788, %v786
        %v969 = vpack.c.b16 %v789, %v787
        %v970 = vpack.c.b16 %v792, %v790
        %v971 = vpack.c.b16 %v793, %v791
        %v972 = vpack.c.b16 %v796, %v794
        %v973 = vpack.c.b16 %v797, %v795
        %v974 = vpack.c.b16 %v800, %v798
        %v975 = vpack.c.b16 %v801, %v799
        %v976 = vpack.c.b16 %v804, %v802
        %v977 = vpack.c.b16 %v805, %v803
        %v978 = vpack.c.b16 %v808, %v806
        %v979 = vpack.c.b16 %v809, %v807
        %v980 = vpack.c.b16 %v812, %v810
        %v981 = vpack.c.b16 %v813, %v811
        %v982 = vpack.c.b16 %v816, %v814
        %v983 = vpack.c.b16 %v817, %v815
        %v984 = vpack.c.b16 %v820, %v818
        %v985 = vpack.c.b16 %v821, %v819
        %v986 = vpack.c.b16 %v824, %v822
        %v987 = vpack.c.b16 %v825, %v823
        %v988 = vpack.c.b16 %v828, %v826
        %v989 = vpack.c.b16 %v829, %v827
        %v990 = vpack.c.b16 %v832, %v830
        %v991 = vpack.c.b16 %v833, %v831
        %v992 = vpack.c.b16 %v836, %v834
        %v993 = vpack.c.b16 %v837, %v835
        %v994 = vpack.c.b16 %v840, %v838
        %v995 = vpack.c.b16 %v841, %v839
        %v996 = vpack.c.b16 %v844, %v842
        %v997 = vpack.c.b16 %v845, %v843
        %v998 = vpack.c.b16 %v848, %v846
        %v999 = vpack.c.b16 %v849, %v847
        %v1000 = vpack.c.b16 %v852, %v850
        %v1001 = vpack.c.b16 %v853, %v851
        %v1002 = vpack.c.b16 %v856, %v854
        %v1003 = vpack.c.b16 %v857, %v855
        %v1004 = vpack.c.b16 %v860, %v858
        %v1005 = vpack.c.b16 %v861, %v859
        %v1006 = vpack.c.b16 %v864, %v862
        %v1007 = vpack.c.b16 %v865, %v863
        %v1008 = vpack.c.b16 %v868, %v866
        %v1009 = vpack.c.b16 %v869, %v867
        %v1010 = vpack.c.b16 %v872, %v870
        %v1011 = vpack.c.b16 %v873, %v871
        %v1012 = vpack.c.b16 %v876, %v874
        %v1013 = vpack.c.b16 %v877, %v875
        %v1014 = vpack.c.b16 %v880, %v878
        %v1015 = vpack.c.b16 %v881, %v879
        %v1016 = vpack.c.b16 %v884, %v882
        %v1017 = vpack.c.b16 %v885, %v883
        %v1018 = vpack.c.b16 %v888, %v886
        %v1019 = vpack.c.b16 %v889, %v887
        %v1020 = vpack.c.b16 %v892, %v890
        %v1021 = vpack.c.b16 %v893, %v891
        %v1022 = vpack.c.b16 %v896, %v894
        %v1023 = vpack.c.b16 %v897, %v895
        %v1024 = vpack.c.b16 %v900, %v898
        %v1025 = vpack.c.b16 %v901, %v899
        %v1026 = vpack.c.b16 %v904, %v902
        %v1027 = vpack.c.b16 %v905, %v903
        %v1028 = vpack.c.b16 %v908, %v906
        %v1029 = vpack.c.b16 %v909, %v907
        %v1030 = vpack.c.b16 %v912, %v910
        %v1031 = vpack.c.b16 %v913, %v911
        %v1032 = vpack.c.b16 %v916, %v914
        %v1033 = vpack.c.b16 %v917, %v915
        %v1034 = vpack.c.b16 %v920, %v918
        %v1035 = vpack.c.b16 %v921, %v919
        %v1036 = vpack.c.b16 %v924, %v922
        %v1037 = vpack.c.b16 %v925, %v923
        %v1038 = vpack.c.b16 %v928, %v926
        %v1039 = vpack.c.b16 %v929, %v927
        %v1040 = vpack.c.b16 %v932, %v930
        %v1041 = vpack.c.b16 %v933, %v931
        %v1042 = vpack.c.b16 %v936, %v934
        %v1043 = vpack.c.b16 %v937, %v935
        %v1044 = vpack.c.b16 %v940, %v938
        %v1045 = vpack.c.b16 %v941, %v939
        %v1046 = vpack.c.b16 %v944, %v942
        %v1047 = vpack.c.b16 %v945, %v943
        %v1048 = vpack.c.b16 %v948, %v946
        %v1049 = vpack.c.b16 %v949, %v947
        %v1050 = vpack.c.b16 %v952, %v950
        %v1051 = vpack.c.b16 %v953, %v951
        %v1052 = vpack.c.b16 %v956, %v954
        %v1053 = vpack.c.b16 %v957, %v955
        %1150 = vmatpush.bf16.msra.mxu0 %v972
        %1151 = vmatpush.bf16.msra.mxu0 %v970
        %1152 = vmatpush.bf16.msra.mxu0 %v968
        %1153 = vmatpush.bf16.msra.mxu0 %v966
        %1154 = vmatpush.bf16.msra.mxu0 %v964
        %1155 = vmatpush.bf16.msra.mxu0 %v962
        %1156 = vmatpush.bf16.msra.mxu0 %v960
        %1157 = vmatpush.bf16.msra.mxu0 %v958
        %1158 = vmatmul.bf16.gmra.mxu0 %v536
        %v1159 = vpop.f32.mrf.mxu0
        %v1160 = vadd.f32 0.0, %v1159
        %v1161 = vpop.f32.mrf.mxu0
        %v1162 = vadd.f32 0.0, %v1161
        %1163 = vmatmul.bf16.gmra.mxu0 %v542
        %v1164 = vpop.f32.mrf.mxu0
        %v1165 = vadd.f32 0.0, %v1164
        %v1166 = vpop.f32.mrf.mxu0
        %v1167 = vadd.f32 0.0, %v1166
        %1168 = vmatmul.bf16.gmra.mxu0 %v548
        %v1169 = vpop.f32.mrf.mxu0
        %v1170 = vadd.f32 0.0, %v1169
        %v1171 = vpop.f32.mrf.mxu0
        %v1172 = vadd.f32 0.0, %v1171
        %1173 = vmatmul.bf16.gmra.mxu0 %v554
        %v1174 = vpop.f32.mrf.mxu0
        %v1175 = vadd.f32 0.0, %v1174
        %v1176 = vpop.f32.mrf.mxu0
        %1177 = vdwg.mxu0
        %1178 = vmatpush.bf16.msra.mxu0 %v988
        %1179 = vmatpush.bf16.msra.mxu0 %v986
        %1180 = vmatpush.bf16.msra.mxu0 %v984
        %1181 = vmatpush.bf16.msra.mxu0 %v982
        %1182 = vmatpush.bf16.msra.mxu0 %v980
        %1183 = vmatpush.bf16.msra.mxu0 %v978
        %1184 = vmatpush.bf16.msra.mxu0 %v976
        %1185 = vmatpush.bf16.msra.mxu0 %v974
        %1186 = vmatmul.bf16.gmra.mxu0 %v537
        %v1187 = vpop.f32.mrf.mxu0
        %v1188 = vadd.f32 %v1160, %v1187
        %v1189 = vpop.f32.mrf.mxu0
        %v1190 = vadd.f32 %v1162, %v1189
        %1191 = vmatmul.bf16.gmra.mxu0 %v543
        %v1192 = vpop.f32.mrf.mxu0
        %v1193 = vadd.f32 %v1165, %v1192
        %v1194 = vpop.f32.mrf.mxu0
        %v1195 = vadd.f32 %v1167, %v1194
        %1196 = vmatmul.bf16.gmra.mxu0 %v549
        %v1197 = vpop.f32.mrf.mxu0
        %v1198 = vadd.f32 %v1170, %v1197
        %v1199 = vpop.f32.mrf.mxu0
        %v1200 = vadd.f32 %v1172, %v1199
        %1201 = vmatmul.bf16.gmra.mxu0 %v555
        %v1202 = vpop.f32.mrf.mxu0
        %v1203 = vadd.f32 %v1175, %v1202
        %v1204 = vpop.f32.mrf.mxu0
        %1205 = vdwg.mxu0
        %1206 = vmatpush.bf16.msra.mxu0 %v1004
        %1207 = vmatpush.bf16.msra.mxu0 %v1002
        %1208 = vmatpush.bf16.msra.mxu0 %v1000
        %1209 = vmatpush.bf16.msra.mxu0 %v998
        %1210 = vmatpush.bf16.msra.mxu0 %v996
        %1211 = vmatpush.bf16.msra.mxu0 %v994
        %1212 = vmatpush.bf16.msra.mxu0 %v992
        %1213 = vmatpush.bf16.msra.mxu0 %v990
        %1214 = vmatmul.bf16.gmra.mxu0 %v538
        %v1215 = vpop.f32.mrf.mxu0
        %v1216 = vadd.f32 %v1188, %v1215
        %v1217 = vpop.f32.mrf.mxu0
        %v1218 = vadd.f32 %v1190, %v1217
        %1219 = vmatmul.bf16.gmra.mxu0 %v544
        %v1220 = vpop.f32.mrf.mxu0
        %v1221 = vadd.f32 %v1193, %v1220
        %v1222 = vpop.f32.mrf.mxu0
        %v1223 = vadd.f32 %v1195, %v1222
        %1224 = vmatmul.bf16.gmra.mxu0 %v550
        %v1225 = vpop.f32.mrf.mxu0
        %v1226 = vadd.f32 %v1198, %v1225
        %v1227 = vpop.f32.mrf.mxu0
        %v1228 = vadd.f32 %v1200, %v1227
        %1229 = vmatmul.bf16.gmra.mxu0 %v556
        %v1230 = vpop.f32.mrf.mxu0
        %v1231 = vadd.f32 %v1203, %v1230
        %v1232 = vpop.f32.mrf.mxu0
        %1233 = vdwg.mxu0
        %1234 = vmatpush.bf16.msra.mxu0 %v1020
        %1235 = vmatpush.bf16.msra.mxu0 %v1018
        %1236 = vmatpush.bf16.msra.mxu0 %v1016
        %1237 = vmatpush.bf16.msra.mxu0 %v1014
        %1238 = vmatpush.bf16.msra.mxu0 %v1012
        %1239 = vmatpush.bf16.msra.mxu0 %v1010
        %1240 = vmatpush.bf16.msra.mxu0 %v1008
        %1241 = vmatpush.bf16.msra.mxu0 %v1006
        %1242 = vmatmul.bf16.gmra.mxu0 %v539
        %v1243 = vpop.f32.mrf.mxu0
        %v1244 = vadd.f32 %v1216, %v1243
        %v1245 = vpop.f32.mrf.mxu0
        %v1246 = vadd.f32 %v1218, %v1245
        %1247 = vmatmul.bf16.gmra.mxu0 %v545
        %v1248 = vpop.f32.mrf.mxu0
        %v1249 = vadd.f32 %v1221, %v1248
        %v1250 = vpop.f32.mrf.mxu0
        %v1251 = vadd.f32 %v1223, %v1250
        %1252 = vmatmul.bf16.gmra.mxu0 %v551
        %v1253 = vpop.f32.mrf.mxu0
        %v1254 = vadd.f32 %v1226, %v1253
        %v1255 = vpop.f32.mrf.mxu0
        %v1256 = vadd.f32 %v1228, %v1255
        %1257 = vmatmul.bf16.gmra.mxu0 %v557
        %v1258 = vpop.f32.mrf.mxu0
        %v1259 = vadd.f32 %v1231, %v1258
        %v1260 = vpop.f32.mrf.mxu0
        %1261 = vdwg.mxu0
        %1262 = vmatpush.bf16.msra.mxu0 %v1036
        %1263 = vmatpush.bf16.msra.mxu0 %v1034
        %1264 = vmatpush.bf16.msra.mxu0 %v1032
        %1265 = vmatpush.bf16.msra.mxu0 %v1030
        %1266 = vmatpush.bf16.msra.mxu0 %v1028
        %1267 = vmatpush.bf16.msra.mxu0 %v1026
        %1268 = vmatpush.bf16.msra.mxu0 %v1024
        %1269 = vmatpush.bf16.msra.mxu0 %v1022
        %1270 = vmatmul.bf16.gmra.mxu0 %v540
        %v1271 = vpop.f32.mrf.mxu0
        %v1272 = vadd.f32 %v1244, %v1271
        %v1273 = vpop.f32.mrf.mxu0
        %v1274 = vadd.f32 %v1246, %v1273
        %1275 = vmatmul.bf16.gmra.mxu0 %v546
        %v1276 = vpop.f32.mrf.mxu0
        %v1277 = vadd.f32 %v1249, %v1276
        %v1278 = vpop.f32.mrf.mxu0
        %v1279 = vadd.f32 %v1251, %v1278
        %1280 = vmatmul.bf16.gmra.mxu0 %v552
        %v1281 = vpop.f32.mrf.mxu0
        %v1282 = vadd.f32 %v1254, %v1281
        %v1283 = vpop.f32.mrf.mxu0
        %v1284 = vadd.f32 %v1256, %v1283
        %1285 = vmatmul.bf16.gmra.mxu0 %v558
        %v1286 = vpop.f32.mrf.mxu0
        %v1287 = vadd.f32 %v1259, %v1286
        %v1288 = vpop.f32.mrf.mxu0
        %1289 = vdwg.mxu0
        %1290 = vmatpush.bf16.msra.mxu0 %v1052
        %1291 = vmatpush.bf16.msra.mxu0 %v1050
        %1292 = vmatpush.bf16.msra.mxu0 %v1048
        %1293 = vmatpush.bf16.msra.mxu0 %v1046
        %1294 = vmatpush.bf16.msra.mxu0 %v1044
        %1295 = vmatpush.bf16.msra.mxu0 %v1042
        %1296 = vmatpush.bf16.msra.mxu0 %v1040
        %1297 = vmatpush.bf16.msra.mxu0 %v1038
        %1298 = vmatmul.bf16.gmra.mxu0 %v541
        %v1299 = vpop.f32.mrf.mxu0
        %v1300 = vadd.f32 %v1272, %v1299
        %v1301 = vpop.f32.mrf.mxu0
        %v1302 = vadd.f32 %v1274, %v1301
        %1303 = vmatmul.bf16.gmra.mxu0 %v547
        %v1304 = vpop.f32.mrf.mxu0
        %v1305 = vadd.f32 %v1277, %v1304
        %v1306 = vpop.f32.mrf.mxu0
        %v1307 = vadd.f32 %v1279, %v1306
        %1308 = vmatmul.bf16.gmra.mxu0 %v553
        %v1309 = vpop.f32.mrf.mxu0
        %v1310 = vadd.f32 %v1282, %v1309
        %v1311 = vpop.f32.mrf.mxu0
        %v1312 = vadd.f32 %v1284, %v1311
        %1313 = vmatmul.bf16.gmra.mxu0 %v559
        %v1314 = vpop.f32.mrf.mxu0
        %v1315 = vadd.f32 %v1287, %v1314
        %v1316 = vpop.f32.mrf.mxu0
        %1317 = vdwg.mxu0
        %1318 = vmatpush.bf16.msra.mxu0 %v973
        %1319 = vmatpush.bf16.msra.mxu0 %v971
        %1320 = vmatpush.bf16.msra.mxu0 %v969
        %1321 = vmatpush.bf16.msra.mxu0 %v967
        %1322 = vmatpush.bf16.msra.mxu0 %v965
        %1323 = vmatpush.bf16.msra.mxu0 %v963
        %1324 = vmatpush.bf16.msra.mxu0 %v961
        %1325 = vmatpush.bf16.msra.mxu0 %v959
        %1326 = vmatmul.bf16.gmra.mxu0 %v536
        %v1327 = vpop.f32.mrf.mxu0
        %v1328 = vadd.f32 0.0, %v1327
        %v1329 = vpop.f32.mrf.mxu0
        %v1330 = vadd.f32 0.0, %v1329
        %1331 = vmatmul.bf16.gmra.mxu0 %v542
        %v1332 = vpop.f32.mrf.mxu0
        %v1333 = vadd.f32 0.0, %v1332
        %v1334 = vpop.f32.mrf.mxu0
        %v1335 = vadd.f32 0.0, %v1334
        %1336 = vmatmul.bf16.gmra.mxu0 %v548
        %v1337 = vpop.f32.mrf.mxu0
        %v1338 = vadd.f32 0.0, %v1337
        %v1339 = vpop.f32.mrf.mxu0
        %v1340 = vadd.f32 0.0, %v1339
        %1341 = vmatmul.bf16.gmra.mxu0 %v554
        %v1342 = vpop.f32.mrf.mxu0
        %v1343 = vadd.f32 0.0, %v1342
        %v1344 = vpop.f32.mrf.mxu0
        %1345 = vdwg.mxu0
        %1346 = vmatpush.bf16.msra.mxu0 %v989
        %1347 = vmatpush.bf16.msra.mxu0 %v987
        %1348 = vmatpush.bf16.msra.mxu0 %v985
        %1349 = vmatpush.bf16.msra.mxu0 %v983
        %1350 = vmatpush.bf16.msra.mxu0 %v981
        %1351 = vmatpush.bf16.msra.mxu0 %v979
        %1352 = vmatpush.bf16.msra.mxu0 %v977
        %1353 = vmatpush.bf16.msra.mxu0 %v975
        %1354 = vmatmul.bf16.gmra.mxu0 %v537
        %v1355 = vpop.f32.mrf.mxu0
        %v1356 = vadd.f32 %v1328, %v1355
        %v1357 = vpop.f32.mrf.mxu0
        %v1358 = vadd.f32 %v1330, %v1357
        %1359 = vmatmul.bf16.gmra.mxu0 %v543
        %v1360 = vpop.f32.mrf.mxu0
        %v1361 = vadd.f32 %v1333, %v1360
        %v1362 = vpop.f32.mrf.mxu0
        %v1363 = vadd.f32 %v1335, %v1362
        %1364 = vmatmul.bf16.gmra.mxu0 %v549
        %v1365 = vpop.f32.mrf.mxu0
        %v1366 = vadd.f32 %v1338, %v1365
        %v1367 = vpop.f32.mrf.mxu0
        %v1368 = vadd.f32 %v1340, %v1367
        %1369 = vmatmul.bf16.gmra.mxu0 %v555
        %v1370 = vpop.f32.mrf.mxu0
        %v1371 = vadd.f32 %v1343, %v1370
        %v1372 = vpop.f32.mrf.mxu0
        %1373 = vdwg.mxu0
        %1374 = vmatpush.bf16.msra.mxu0 %v1005
        %1375 = vmatpush.bf16.msra.mxu0 %v1003
        %1376 = vmatpush.bf16.msra.mxu0 %v1001
        %1377 = vmatpush.bf16.msra.mxu0 %v999
        %1378 = vmatpush.bf16.msra.mxu0 %v997
        %1379 = vmatpush.bf16.msra.mxu0 %v995
        %1380 = vmatpush.bf16.msra.mxu0 %v993
        %1381 = vmatpush.bf16.msra.mxu0 %v991
        %1382 = vmatmul.bf16.gmra.mxu0 %v538
        %v1383 = vpop.f32.mrf.mxu0
        %v1384 = vadd.f32 %v1356, %v1383
        %v1385 = vpop.f32.mrf.mxu0
        %v1386 = vadd.f32 %v1358, %v1385
        %1387 = vmatmul.bf16.gmra.mxu0 %v544
        %v1388 = vpop.f32.mrf.mxu0
        %v1389 = vadd.f32 %v1361, %v1388
        %v1390 = vpop.f32.mrf.mxu0
        %v1391 = vadd.f32 %v1363, %v1390
        %1392 = vmatmul.bf16.gmra.mxu0 %v550
        %v1393 = vpop.f32.mrf.mxu0
        %v1394 = vadd.f32 %v1366, %v1393
        %v1395 = vpop.f32.mrf.mxu0
        %v1396 = vadd.f32 %v1368, %v1395
        %1397 = vmatmul.bf16.gmra.mxu0 %v556
        %v1398 = vpop.f32.mrf.mxu0
        %v1399 = vadd.f32 %v1371, %v1398
        %v1400 = vpop.f32.mrf.mxu0
        %1401 = vdwg.mxu0
        %1402 = vmatpush.bf16.msra.mxu0 %v1021
        %1403 = vmatpush.bf16.msra.mxu0 %v1019
        %1404 = vmatpush.bf16.msra.mxu0 %v1017
        %1405 = vmatpush.bf16.msra.mxu0 %v1015
        %1406 = vmatpush.bf16.msra.mxu0 %v1013
        %1407 = vmatpush.bf16.msra.mxu0 %v1011
        %1408 = vmatpush.bf16.msra.mxu0 %v1009
        %1409 = vmatpush.bf16.msra.mxu0 %v1007
        %1410 = vmatmul.bf16.gmra.mxu0 %v539
        %v1411 = vpop.f32.mrf.mxu0
        %v1412 = vadd.f32 %v1384, %v1411
        %v1413 = vpop.f32.mrf.mxu0
        %v1414 = vadd.f32 %v1386, %v1413
        %1415 = vmatmul.bf16.gmra.mxu0 %v545
        %v1416 = vpop.f32.mrf.mxu0
        %v1417 = vadd.f32 %v1389, %v1416
        %v1418 = vpop.f32.mrf.mxu0
        %v1419 = vadd.f32 %v1391, %v1418
        %1420 = vmatmul.bf16.gmra.mxu0 %v551
        %v1421 = vpop.f32.mrf.mxu0
        %v1422 = vadd.f32 %v1394, %v1421
        %v1423 = vpop.f32.mrf.mxu0
        %v1424 = vadd.f32 %v1396, %v1423
        %1425 = vmatmul.bf16.gmra.mxu0 %v557
        %v1426 = vpop.f32.mrf.mxu0
        %v1427 = vadd.f32 %v1399, %v1426
        %v1428 = vpop.f32.mrf.mxu0
        %1429 = vdwg.mxu0
        %1430 = vmatpush.bf16.msra.mxu0 %v1037
        %1431 = vmatpush.bf16.msra.mxu0 %v1035
        %1432 = vmatpush.bf16.msra.mxu0 %v1033
        %1433 = vmatpush.bf16.msra.mxu0 %v1031
        %1434 = vmatpush.bf16.msra.mxu0 %v1029
        %1435 = vmatpush.bf16.msra.mxu0 %v1027
        %1436 = vmatpush.bf16.msra.mxu0 %v1025
        %1437 = vmatpush.bf16.msra.mxu0 %v1023
        %1438 = vmatmul.bf16.gmra.mxu0 %v540
        %v1439 = vpop.f32.mrf.mxu0
        %v1440 = vadd.f32 %v1412, %v1439
        %v1441 = vpop.f32.mrf.mxu0
        %v1442 = vadd.f32 %v1414, %v1441
        %1443 = vmatmul.bf16.gmra.mxu0 %v546
        %v1444 = vpop.f32.mrf.mxu0
        %v1445 = vadd.f32 %v1417, %v1444
        %v1446 = vpop.f32.mrf.mxu0
        %v1447 = vadd.f32 %v1419, %v1446
        %1448 = vmatmul.bf16.gmra.mxu0 %v552
        %v1449 = vpop.f32.mrf.mxu0
        %v1450 = vadd.f32 %v1422, %v1449
        %v1451 = vpop.f32.mrf.mxu0
        %v1452 = vadd.f32 %v1424, %v1451
        %1453 = vmatmul.bf16.gmra.mxu0 %v558
        %v1454 = vpop.f32.mrf.mxu0
        %v1455 = vadd.f32 %v1427, %v1454
        %v1456 = vpop.f32.mrf.mxu0
        %1457 = vdwg.mxu0
        %1458 = vmatpush.bf16.msra.mxu0 %v1053
        %1459 = vmatpush.bf16.msra.mxu0 %v1051
        %1460 = vmatpush.bf16.msra.mxu0 %v1049
        %1461 = vmatpush.bf16.msra.mxu0 %v1047
        %1462 = vmatpush.bf16.msra.mxu0 %v1045
        %1463 = vmatpush.bf16.msra.mxu0 %v1043
        %1464 = vmatpush.bf16.msra.mxu0 %v1041
        %1465 = vmatpush.bf16.msra.mxu0 %v1039
        %1466 = vmatmul.bf16.gmra.mxu0 %v541
        %v1467 = vpop.f32.mrf.mxu0
        %v1468 = vadd.f32 %v1440, %v1467
        %v1469 = vpop.f32.mrf.mxu0
        %v1470 = vadd.f32 %v1442, %v1469
        %1471 = vmatmul.bf16.gmra.mxu0 %v547
        %v1472 = vpop.f32.mrf.mxu0
        %v1473 = vadd.f32 %v1445, %v1472
        %v1474 = vpop.f32.mrf.mxu0
        %v1475 = vadd.f32 %v1447, %v1474
        %1476 = vmatmul.bf16.gmra.mxu0 %v553
        %v1477 = vpop.f32.mrf.mxu0
        %v1478 = vadd.f32 %v1450, %v1477
        %v1479 = vpop.f32.mrf.mxu0
        %v1480 = vadd.f32 %v1452, %v1479
        %1481 = vmatmul.bf16.gmra.mxu0 %v559
        %v1482 = vpop.f32.mrf.mxu0
        %v1483 = vadd.f32 %v1455, %v1482
        %v1484 = vpop.f32.mrf.mxu0
        %1485 = vdwg.mxu0
        %v1486 = vadd.f32 %v560, %v1300
        %v1487 = vadd.f32 %v561, %v1468
        %v1488 = vadd.f32 %v562, %v1302
        %v1489 = vadd.f32 %v563, %v1470
        %v1490 = vadd.f32 %v564, %v1305
        %v1491 = vadd.f32 %v565, %v1473
        %v1492 = vadd.f32 %v566, %v1307
        %v1493 = vadd.f32 %v567, %v1475
        %v1494 = vadd.f32 %v568, %v1310
        %v1495 = vadd.f32 %v569, %v1478
        %v1496 = vadd.f32 %v570, %v1312
        %v1497 = vadd.f32 %v571, %v1480
        %v1498 = vadd.f32 %v572, %v1315
        %v1499 = vadd.f32 %v573, %v1483
        %1500 = vst [vmem:[#allocation2] sm:$0xff] %v1486
        %1501 = vst [vmem:[#allocation2 + $0x8] sm:$0xff] %v1487
        %1502 = vst [vmem:[#allocation2 + $0x10] sm:$0xff] %v1488
        %1503 = vst [vmem:[#allocation2 + $0x18] sm:$0xff] %v1489
        %1504 = vst [vmem:[#allocation2 + $0x20] sm:$0xff] %v1490
        %1505 = vst [vmem:[#allocation2 + $0x28] sm:$0xff] %v1491
        %1506 = vst [vmem:[#allocation2 + $0x30] sm:$0xff] %v1492
        %1507 = vst [vmem:[#allocation2 + $0x38] sm:$0xff] %v1493
        %1508 = vst [vmem:[#allocation2 + $0x40] sm:$0xff] %v1494
        %1509 = vst [vmem:[#allocation2 + $0x48] sm:$0xff] %v1495
        %1510 = vst [vmem:[#allocation2 + $0x50] sm:$0xff] %v1496
        %1511 = vst [vmem:[#allocation2 + $0x58] sm:$0xff] %v1497
        %1512 = vst [vmem:[#allocation2 + $0x60] sm:$0x1] %v1498
        %1513 = vst [vmem:[#allocation2 + $0x68] sm:$0x1] %v1499
        %p1514 = scmp.eq.s32.totalorder %s24, 3
        // Predicated region
        $region72: #{fused_forward.1} parent=58 // pred_check
          %p1515 = pneg %p1514
        $region73: #{fused_forward.1} parent=58 // pred_check_branch
          %1517 = sbr.rel (%p1515) target = $region75
        $region74: #{fused_forward.1} parent=58 // pred_region
          %v1518 = vld [vmem:[#allocation2] sm:$0xff]
          %v1519 = vld [vmem:[#allocation2 + $0x8] sm:$0xff]
          %v1520 = vld [vmem:[#allocation2 + $0x10] sm:$0xff]
          %v1521 = vld [vmem:[#allocation2 + $0x18] sm:$0xff]
          %v1522 = vld [vmem:[#allocation2 + $0x20] sm:$0xff]
          %v1523 = vld [vmem:[#allocation2 + $0x28] sm:$0xff]
          %v1524 = vld [vmem:[#allocation2 + $0x30] sm:$0xff]
          %v1525 = vld [vmem:[#allocation2 + $0x38] sm:$0xff]
          %v1526 = vld [vmem:[#allocation2 + $0x40] sm:$0xff]
          %v1527 = vld [vmem:[#allocation2 + $0x48] sm:$0xff]
          %v1528 = vld [vmem:[#allocation2 + $0x50] sm:$0xff]
          %v1529 = vld [vmem:[#allocation2 + $0x58] sm:$0xff]
          %v1530 = vld [vmem:[#allocation2 + $0x60] sm:$0x1]
          %v1531 = vld [vmem:[#allocation2 + $0x68] sm:$0x1]
          %v1532 = vadd.f32 %v1518, %v1520
          %v1533 = vadd.f32 %v1532, %v1522
          %v1534 = vadd.f32 %v1533, %v1524
          %v1535 = vadd.f32 %v1534, %v1526
          %v1536 = vadd.f32 %v1535, %v1528
          %vm1537 = vcmask 1040384
          %v1538 = vsel %vm1537, %v1530, 0.0
          %v1539 = vadd.f32 %v1536, %v1538
          %v1540 = vrot.slane %v1539, 4
          %v1541 = vadd.f32 %v1539, %v1540
          %v1542 = vrot.slane %v1541, 2
          %v1543 = vadd.f32 %v1541, %v1542
          %v1544 = vrot.slane %v1543, 1
          %v1545 = vadd.f32 %v1543, %v1544
          %v1546 = vadd.f32 %v1519, %v1521
          %v1547 = vadd.f32 %v1546, %v1523
          %v1548 = vadd.f32 %v1547, %v1525
          %v1549 = vadd.f32 %v1548, %v1527
          %v1550 = vadd.f32 %v1549, %v1529
          %v1551 = vsel %vm1537, %v1531, 0.0
          %v1552 = vadd.f32 %v1550, %v1551
          %v1553 = vrot.slane %v1552, 4
          %v1554 = vadd.f32 %v1552, %v1553
          %v1555 = vrot.slane %v1554, 2
          %v1556 = vadd.f32 %v1554, %v1555
          %v1557 = vrot.slane %v1556, 1
          %v1558 = vadd.f32 %v1556, %v1557
          %v1559 = vmul.f32 %v1545, 0.020408163
          %v1560 = vmul.f32 %v1558, 0.020408163
          %v1561 = vmul.f32 %v1518, %v1518
          %v1562 = vmul.f32 %v1519, %v1519
          %v1563 = vmul.f32 %v1520, %v1520
          %v1564 = vmul.f32 %v1521, %v1521
          %v1565 = vmul.f32 %v1522, %v1522
          %v1566 = vmul.f32 %v1523, %v1523
          %v1567 = vmul.f32 %v1524, %v1524
          %v1568 = vmul.f32 %v1525, %v1525
          %v1569 = vmul.f32 %v1526, %v1526
          %v1570 = vmul.f32 %v1527, %v1527
          %v1571 = vmul.f32 %v1528, %v1528
          %v1572 = vmul.f32 %v1529, %v1529
          %v1573 = vmul.f32 %v1530, %v1530
          %v1574 = vmul.f32 %v1531, %v1531
          %v1575 = vadd.f32 %v1561, %v1563
          %v1576 = vadd.f32 %v1575, %v1565
          %v1577 = vadd.f32 %v1576, %v1567
          %v1578 = vadd.f32 %v1577, %v1569
          %v1579 = vadd.f32 %v1578, %v1571
          %v1580 = vsel %vm1537, %v1573, 0.0
          %v1581 = vadd.f32 %v1579, %v1580
          %v1582 = vrot.slane %v1581, 4
          %v1583 = vadd.f32 %v1581, %v1582
          %v1584 = vrot.slane %v1583, 2
          %v1585 = vadd.f32 %v1583, %v1584
          %v1586 = vrot.slane %v1585, 1
          %v1587 = vadd.f32 %v1585, %v1586
          %v1588 = vadd.f32 %v1562, %v1564
          %v1589 = vadd.f32 %v1588, %v1566
          %v1590 = vadd.f32 %v1589, %v1568
          %v1591 = vadd.f32 %v1590, %v1570
          %v1592 = vadd.f32 %v1591, %v1572
          %v1593 = vsel %vm1537, %v1574, 0.0
          %v1594 = vadd.f32 %v1592, %v1593
          %v1595 = vrot.slane %v1594, 4
          %v1596 = vadd.f32 %v1594, %v1595
          %v1597 = vrot.slane %v1596, 2
          %v1598 = vadd.f32 %v1596, %v1597
          %v1599 = vrot.slane %v1598, 1
          %v1600 = vadd.f32 %v1598, %v1599
          %v1601 = vmul.f32 %v1587, 0.020408163
          %v1602 = vmul.f32 %v1600, 0.020408163
          %v1603 = vmul.f32 %v1559, %v1559
          %v1604 = vmul.f32 %v1560, %v1560
          %v1605 = vsub.f32 %v1601, %v1603
          %v1606 = vsub.f32 %v1602, %v1604
          %v1607 = vmax.f32 %v1605, 0.0
          %v1608 = vmax.f32 %v1606, 0.0
          %v1609 = vsub.f32 %v1518, %v1559
          %v1610 = vsub.f32 %v1519, %v1560
          %v1611 = vsub.f32 %v1520, %v1559
          %v1612 = vsub.f32 %v1521, %v1560
          %v1613 = vsub.f32 %v1522, %v1559
          %v1614 = vsub.f32 %v1523, %v1560
          %v1615 = vsub.f32 %v1524, %v1559
          %v1616 = vsub.f32 %v1525, %v1560
          %v1617 = vsub.f32 %v1526, %v1559
          %v1618 = vsub.f32 %v1527, %v1560
          %v1619 = vsub.f32 %v1528, %v1559
          %v1620 = vsub.f32 %v1529, %v1560
          %v1621 = vsub.f32 %v1530, %v1559
          %v1622 = vsub.f32 %v1531, %v1560
          %v1623 = vadd.f32 %v1607, 0.001
          %v1624 = vadd.f32 %v1608, 0.001
          %v1625 = vrsqrt.pop %v1623
          %v1626 = vmul.f32 %v1625, %v1623
          %v1627 = vmul.f32 %v1626, %v1625
          %v1628 = vmul.f32 0.5, %v1627
          %v1629 = vsub.f32 1.5, %v1628
          %v1630 = vmul.f32 %v1625, %v1629
          %vm1631 = vweird.f32 %v1623
          %vm1632 = vweird.f32 %v1625
          %vm1633 = vmor %vm1631, %vm1632
          %v1634 = vsel %vm1633, %v1625, %v1630
          %v1635 = vrsqrt.pop %v1624
          %v1636 = vmul.f32 %v1635, %v1624
          %v1637 = vmul.f32 %v1636, %v1635
          %v1638 = vmul.f32 0.5, %v1637
          %v1639 = vsub.f32 1.5, %v1638
          %v1640 = vmul.f32 %v1635, %v1639
          %vm1641 = vweird.f32 %v1624
          %vm1642 = vweird.f32 %v1635
          %vm1643 = vmor %vm1641, %vm1642
          %v1644 = vsel %vm1643, %v1635, %v1640
          %v1645 = vmul.f32 %v1609, %v1634
          %v1646 = vmul.f32 %v1610, %v1644
          %v1647 = vmul.f32 %v1611, %v1634
          %v1648 = vmul.f32 %v1612, %v1644
          %v1649 = vmul.f32 %v1613, %v1634
          %v1650 = vmul.f32 %v1614, %v1644
          %v1651 = vmul.f32 %v1615, %v1634
          %v1652 = vmul.f32 %v1616, %v1644
          %v1653 = vmul.f32 %v1617, %v1634
          %v1654 = vmul.f32 %v1618, %v1644
          %v1655 = vmul.f32 %v1619, %v1634
          %v1656 = vmul.f32 %v1620, %v1644
          %v1657 = vmul.f32 %v1621, %v1634
          %v1658 = vmul.f32 %v1622, %v1644
          %v1659 = vld [vmem:[%s391] sm:$0x3]
          %v1661 = vperm.slane %v1659, 0
          %v1662 = vperm.slane %v1659, 1
          %v1665 = vmul.f32 %v1645, %v1661
          %v1666 = vmul.f32 %v1646, %v1662
          %v1667 = vmul.f32 %v1647, %v1661
          %v1668 = vmul.f32 %v1648, %v1662
          %v1669 = vmul.f32 %v1649, %v1661
          %v1670 = vmul.f32 %v1650, %v1662
          %v1671 = vmul.f32 %v1651, %v1661
          %v1672 = vmul.f32 %v1652, %v1662
          %v1673 = vmul.f32 %v1653, %v1661
          %v1674 = vmul.f32 %v1654, %v1662
          %v1675 = vmul.f32 %v1655, %v1661
          %v1676 = vmul.f32 %v1656, %v1662
          %v1677 = vmul.f32 %v1657, %v1661
          %v1678 = vmul.f32 %v1658, %v1662
          %v1679 = vld [vmem:[%s396] sm:$0x3]
          %v1681 = vperm.slane %v1679, 0
          %v1682 = vperm.slane %v1679, 1
          %v1685 = vadd.f32 %v1665, %v1681
          %v1686 = vadd.f32 %v1666, %v1682
          %v1687 = vadd.f32 %v1667, %v1681
          %v1688 = vadd.f32 %v1668, %v1682
          %v1689 = vadd.f32 %v1669, %v1681
          %v1690 = vadd.f32 %v1670, %v1682
          %v1691 = vadd.f32 %v1671, %v1681
          %v1692 = vadd.f32 %v1672, %v1682
          %v1693 = vadd.f32 %v1673, %v1681
          %v1694 = vadd.f32 %v1674, %v1682
          %v1695 = vadd.f32 %v1675, %v1681
          %v1696 = vadd.f32 %v1676, %v1682
          %v1697 = vadd.f32 %v1677, %v1681
          %v1698 = vadd.f32 %v1678, %v1682
          %1699 = vst [vmem:[%s379] sm:$0xff] %v1685
          %1700 = vst [vmem:[%s379 + $0x8] sm:$0xff] %v1686
          %1701 = vst [vmem:[%s379 + $0x10] sm:$0xff] %v1687
          %1702 = vst [vmem:[%s379 + $0x18] sm:$0xff] %v1688
          %1703 = vst [vmem:[%s379 + $0x20] sm:$0xff] %v1689
          %1704 = vst [vmem:[%s379 + $0x28] sm:$0xff] %v1690
          %1705 = vst [vmem:[%s379 + $0x30] sm:$0xff] %v1691
          %1706 = vst [vmem:[%s379 + $0x38] sm:$0xff] %v1692
          %1707 = vst [vmem:[%s379 + $0x40] sm:$0xff] %v1693
          %1708 = vst [vmem:[%s379 + $0x48] sm:$0xff] %v1694
          %1709 = vst [vmem:[%s379 + $0x50] sm:$0xff] %v1695
          %1710 = vst [vmem:[%s379 + $0x58] sm:$0xff] %v1696
          %1711 = vst [vmem:[%s379 + $0x60] sm:$0x1] %v1697
          %1712 = vst [vmem:[%s379 + $0x68] sm:$0x1] %v1698
        $region75: #{fused_forward.1} parent=58 // pred_fallthru
          _
        %s1713 = sand.u32 %s171, 1
        %s1714 = sand.u32 %s171, 1
        %s1715 = smul.addr %s1714, 112
        %s1716 = scalar_lea.vmem [#allocation6], %s1715
        // Predicated region
        $region76: #{fused_forward.1} parent=58 // pred_check
          %p1717 = pneg %p181
        $region77: #{fused_forward.1} parent=58 // pred_check_branch
          %1719 = sbr.rel (%p1717) target = $region79
        $region78: #{fused_forward.1} parent=58 // pred_region
          %s1720 = smul.u32 2, %s23
          %s1721 = smul.addr %s1720, 8
          %s1722 = scalar_lea.vmem %s5, %s1721
          // Predicated region
          $region80: #{fused_forward.1} parent=78 // pred_check
            _
          $region81: #{fused_forward.1} parent=78 // pred_check_branch
            %1724 = sbr.rel (0) target = $region83
          $region82: #{fused_forward.1} parent=78 // pred_region
            // Predicated region
            $region84: #{fused_forward.1} parent=82 // pred_check
              _
            $region85: #{fused_forward.1} parent=82 // pred_check_branch
              %1726 = sbr.rel (0) target = $region87
            $region86: #{fused_forward.1} parent=82 // pred_region
              loop: start=0, step=1, limit=1
              $region88: #{fused_forward.1} parent=86 // loop_pre_header
                _
              $region89: #{fused_forward.1} parent=86 // loop_header
                %s1728 = sphi 0, %s1732
                %p1729 = scmp.ge.s32.totalorder %s1728, 1
                %s1733 = sphi %s1716, %s1716
                %s1734 = sphi %s1722, %s1722
              $region90: #{fused_forward.1} parent=86 // loop_header_branch
                %1731 = sbr.rel (%p1729) target = $region94
              $region91: #{fused_forward.1} parent=86 // loop_body
                %v1735 = vld [vmem:[%s1733] sm:$0xff]
                %1736 = vst [vmem:[%s1734] sm:$0xff] %v1735
                %v1737 = vld [vmem:[%s1733 + $0x8] sm:$0xff]
                %1738 = vst [vmem:[%s1734 + $0x8] sm:$0xff] %v1737
                %v1739 = vld [vmem:[%s1733 + $0x10] sm:$0xff]
                %1740 = vst [vmem:[%s1734 + $0x20] sm:$0xff] %v1739
                %v1741 = vld [vmem:[%s1733 + $0x18] sm:$0xff]
                %1742 = vst [vmem:[%s1734 + $0x28] sm:$0xff] %v1741
                %v1743 = vld [vmem:[%s1733 + $0x20] sm:$0xff]
                %1744 = vst [vmem:[%s1734 + $0x40] sm:$0xff] %v1743
                %v1745 = vld [vmem:[%s1733 + $0x28] sm:$0xff]
                %1746 = vst [vmem:[%s1734 + $0x48] sm:$0xff] %v1745
                %v1747 = vld [vmem:[%s1733 + $0x30] sm:$0xff]
                %1748 = vst [vmem:[%s1734 + $0x60] sm:$0xff] %v1747
                %v1749 = vld [vmem:[%s1733 + $0x38] sm:$0xff]
                %1750 = vst [vmem:[%s1734 + $0x68] sm:$0xff] %v1749
                %v1751 = vld [vmem:[%s1733 + $0x40] sm:$0xff]
                %1752 = vst [vmem:[%s1734 + $0x80] sm:$0xff] %v1751
                %v1753 = vld [vmem:[%s1733 + $0x48] sm:$0xff]
                %1754 = vst [vmem:[%s1734 + $0x88] sm:$0xff] %v1753
                %v1755 = vld [vmem:[%s1733 + $0x50] sm:$0xff]
                %1756 = vst [vmem:[%s1734 + $0xa0] sm:$0xff] %v1755
                %v1757 = vld [vmem:[%s1733 + $0x58] sm:$0xff]
                %1758 = vst [vmem:[%s1734 + $0xa8] sm:$0xff] %v1757
                %v1759 = vld [vmem:[%s1733 + $0x60] sm:$0xff]
                %1760 = vst [vmem:[%s1734 + $0xc0] sm:$0xff] %v1759
                %v1761 = vld [vmem:[%s1733 + $0x68] sm:$0xff]
                %1762 = vst [vmem:[%s1734 + $0xc8] sm:$0xff] %v1761
              $region92: #{fused_forward.1} parent=86 // loop_footer
                %s1732 = sadd.s32 1, %s1728
              $region93: #{fused_forward.1} parent=86 // loop_footer_branch
                %1727 = sbr.rel target = $region89
              $region94: #{fused_forward.1} parent=86 // loop_exit
                _
            $region87: #{fused_forward.1} parent=82 // pred_fallthru
              _
            // Predicated region
            $region95: #{fused_forward.1} parent=82 // pred_check
              _
            $region96: #{fused_forward.1} parent=82 // pred_check_branch
              %1764 = sbr.rel target = $region98
            $region97: #{fused_forward.1} parent=82 // pred_region
              _
            $region98: #{fused_forward.1} parent=82 // pred_fallthru
              _
          $region83: #{fused_forward.1} parent=78 // pred_fallthru
            _
          %1765 = vnop
        $region79: #{fused_forward.1} parent=58 // pred_fallthru
          _
      $region59: #{fused_forward.1} parent=5 // pred_fallthru
        _
      %p1766 = scmp.le.s32.totalorder 2, %s14
      // Predicated region
      $region99: #{fused_forward.1} parent=5 // pred_check
        %p1767 = pneg %p1766
      $region100: #{fused_forward.1} parent=5 // pred_check_branch
        %1769 = sbr.rel (%p1767) target = $region102
      $region101: #{fused_forward.1} parent=5 // pred_region
        %s1770 = ssub.s32 %s14, 2
        // Predicated region
        $region103: #{fused_forward.1} parent=101 // pred_check
          %p1771 = pneg %p187
        $region104: #{fused_forward.1} parent=101 // pred_check_branch
          %1773 = sbr.rel (%p1771) target = $region106
        $region105: #{fused_forward.1} parent=101 // pred_region
          %s1774 = sand.u32 %s172, 1
          %s1775 = sand.u32 %s172, 1
          %s1776 = smul.addr %s1775, 112
          %s1777 = scalar_lea.vmem [#allocation6], %s1776
        $region106: #{fused_forward.1} parent=101 // pred_fallthru
          _
      $region102: #{fused_forward.1} parent=5 // pred_fallthru
        _
    $region6: #{fused_forward.1} parent=1 // loop_footer
      %s18 = sadd.s32 1, %s14
    $region7: #{fused_forward.1} parent=1 // loop_footer_branch
      %13 = sbr.rel target = $region3
    $region8: #{fused_forward.1} parent=1 // loop_exit
      _
    %1778 = vsyncpa [#allocation5], 1
    %s1779 = scalar_lea.sflag [#allocation5], 1
    %1780 = vsyncpa %s1779, 1

</llo_original>
